<compile_context>
chip_gen: v5e
topology: v5e:2x2
jax: 0.10.0
libtpu: 0.0.40
codegen_flags: <defaults>
</compile_context>

<pallas_src>
import functools

import jax
import jax.numpy as jnp
import numpy as np
from jax.experimental import pallas as pl
from jax.experimental.pallas import tpu as pltpu

NUM_EXTRA_FEATURES = 8   # len(config.ROBOT_STATES) for the demo
HIDDEN = 512             # fixed by the module
OUT_DIM = 6              # fixed by the module
OUT_PAD = 128            # lane-dense padded head width


def _round_up(x, m):
    return (x + m - 1) // m * m


def _mlp_kernel(x_ref, w1_ref, b1_ref, w2_ref, b2_ref,
                w3_ref, b3_ref, w4_ref, b4_ref, o_ref):
    """Fused 4-layer MLP. Matmuls on the MXU with f32 accumulation; bias/ReLU in f32."""
    # TODO(synk): Dropout is identity in eval mode; a training-mode mask would need
    # pltpu.prng_seed / pltpu.prng_random_bits.
    h = jnp.dot(x_ref[...], w1_ref[...], preferred_element_type=jnp.float32)
    h = jnp.maximum(h + b1_ref[...], 0.0)

    h = jnp.dot(h.astype(jnp.bfloat16), w2_ref[...],
                preferred_element_type=jnp.float32)
    h = jnp.maximum(h + b2_ref[...], 0.0)

    h = jnp.dot(h.astype(jnp.bfloat16), w3_ref[...],
                preferred_element_type=jnp.float32)
    h = jnp.maximum(h + b3_ref[...], 0.0)

    out = jnp.dot(h.astype(jnp.bfloat16), w4_ref[...],
                  preferred_element_type=jnp.float32)
    o_ref[...] = (out + b4_ref[...]).astype(o_ref.dtype)


def _prepare_params(params):
    """Cast weights to bf16, biases to f32 rows, and pad the 6-wide head to 128 lanes."""
    w1 = params["w1"].astype(jnp.bfloat16)
    w2 = params["w2"].astype(jnp.bfloat16)
    w3 = params["w3"].astype(jnp.bfloat16)
    b1 = params["b1"].astype(jnp.float32).reshape(1, HIDDEN)
    b2 = params["b2"].astype(jnp.float32).reshape(1, HIDDEN)
    b3 = params["b3"].astype(jnp.float32).reshape(1, HIDDEN)
    w4p = jnp.zeros((HIDDEN, OUT_PAD), jnp.bfloat16)
    w4p = w4p.at[:, :OUT_DIM].set(params["w4"].astype(jnp.bfloat16))
    b4p = jnp.zeros((1, OUT_PAD), jnp.float32)
    b4p = b4p.at[:, :OUT_DIM].set(params["b4"].astype(jnp.float32))
    return w1, b1, w2, b2, w3, b3, w4p, b4p


def fc_layers_forward(states, params):
    """Apply the fc_layers MLP to `states` (B, F) with a single fused Pallas call."""
    b, f = states.shape
    w1, b1, w2, b2, w3, b3, w4p, b4p = _prepare_params(params)

    # Batch tiling: one grid point for small B, else 256-row tiles
    # (matches v6e/v7x 256-wide MXU; a clean multiple of v5e's 128 too).
    if b <= 512:
        tm = _round_up(max(b, 1), 8)
    else:
        tm = 256
    b_pad = _round_up(b, tm)
    x = jnp.zeros((b_pad, f), jnp.bfloat16).at[:b, :].set(states.astype(jnp.bfloat16))

    grid = (b_pad // tm,)
    const2d = lambda i: (0, 0)   # weights/biases: block index never changes -> resident in VMEM
    batch2d = lambda i: (i, 0)

    out_padded = pl.pallas_call(
        _mlp_kernel,
        out_shape=jax.ShapeDtypeStruct((b_pad, OUT_PAD), jnp.float32),
        grid_spec=pltpu.PrefetchScalarGridSpec(
            num_scalar_prefetch=0,
            grid=grid,
            in_specs=[
                pl.BlockSpec((tm, f), batch2d),           # states tile
                pl.BlockSpec((f, HIDDEN), const2d),       # W1
                pl.BlockSpec((1, HIDDEN), const2d),       # b1
                pl.BlockSpec((HIDDEN, HIDDEN), const2d),  # W2
                pl.BlockSpec((1, HIDDEN), const2d),       # b2
                pl.BlockSpec((HIDDEN, HIDDEN), const2d),  # W3
                pl.BlockSpec((1, HIDDEN), const2d),       # b3
                pl.BlockSpec((HIDDEN, OUT_PAD), const2d), # W4 (padded)
                pl.BlockSpec((1, OUT_PAD), const2d),      # b4 (padded)
            ],
            out_specs=pl.BlockSpec((tm, OUT_PAD), batch2d),
        ),
        compiler_params=pltpu.CompilerParams(
            dimension_semantics=("parallel",)),
    )(x, w1, b1, w2, b2, w3, b3, w4p, b4p)
    return out_padded[:b, :OUT_DIM]


@functools.partial(jax.jit, static_argnames=())
def model_forward(img, states, params):
    """Equivalent of Model.forward(img, states) in eval mode.

    `x = states` in the reference discards the conv features, so the backbone
    never affects the output; `img` is accepted and dropped here (never passed
    to the pallas_call, so no HBM->VMEM DMA is issued for it)."""
    del img  # dead w.r.t. the returned value
    # TODO(synk): the reference reshape(-1, num_visual_features + num_extra_features)
    # is shape-inconsistent with nn.Linear(num_extra_features, 512); we implement the
    # only consistent interpretation (fc_layers consumes `states` of shape (B, F)).
    return fc_layers_forward(states, params)


def init_params(key, f):
    """Deterministic PyTorch-style Linear init: U(-1/sqrt(fan_in), 1/sqrt(fan_in))."""
    ks = jax.random.split(key, 8)

    def lin(kw, kb, fan_in, fan_out):
        bound = 1.0 / np.sqrt(fan_in)
        w = jax.random.uniform(kw, (fan_in, fan_out), jnp.float32, -bound, bound)
        b_ = jax.random.uniform(kb, (fan_out,), jnp.float32, -bound, bound)
        return w, b_

    w1, b1 = lin(ks[0], ks[1], f, HIDDEN)
    w2, b2 = lin(ks[2], ks[3], HIDDEN, HIDDEN)
    w3, b3 = lin(ks[4], ks[5], HIDDEN, HIDDEN)
    w4, b4 = lin(ks[6], ks[7], HIDDEN, OUT_DIM)
    return dict(w1=w1, b1=b1, w2=w2, b2=b2, w3=w3, b3=b3, w4=w4, b4=b4)


def reference_forward(states, params):
    """Pure-JAX reference using the same bf16-in / f32-accumulate numerics."""
    h = states.astype(jnp.bfloat16)
    h = jnp.dot(h, params["w1"].astype(jnp.bfloat16),
                preferred_element_type=jnp.float32) + params["b1"]
    h = jnp.maximum(h, 0.0)
    h = jnp.dot(h.astype(jnp.bfloat16), params["w2"].astype(jnp.bfloat16),
                preferred_element_type=jnp.float32) + params["b2"]
    h = jnp.maximum(h, 0.0)
    h = jnp.dot(h.astype(jnp.bfloat16), params["w3"].astype(jnp.bfloat16),
                preferred_element_type=jnp.float32) + params["b3"]
    h = jnp.maximum(h, 0.0)
    return jnp.dot(h.astype(jnp.bfloat16), params["w4"].astype(jnp.bfloat16),
                   preferred_element_type=jnp.float32) + params["b4"]


if __name__ == "__main__":
    key = jax.random.PRNGKey(0)
    k_img, k_states, k_params = jax.random.split(key, 3)

    B = 2
    img = jax.random.normal(k_img, (B, 3, 64, 64), jnp.float32)       # unused (dead in forward)
    states = jax.random.normal(k_states, (B, NUM_EXTRA_FEATURES), jnp.float32)
    params = init_params(k_params, NUM_EXTRA_FEATURES)

    out = jax.block_until_ready(model_forward(img, states, params))
    assert out.shape == (B, OUT_DIM), out.shape

    ref = jax.block_until_ready(reference_forward(states, params))
    np.testing.assert_allclose(np.asarray(out), np.asarray(ref), rtol=2e-2, atol=2e-2)

    print("KERNEL_OK")
</pallas_src>

<mosaic_0001>
module attributes {stable_mosaic.version = 11 : i64} {
  func.func @_mlp_kernel(%arg0: i32, %arg1: memref<8x8xbf16, #tpu.memory_space<vmem>>, %arg2: memref<8x512xbf16, #tpu.memory_space<vmem>>, %arg3: memref<1x512xf32, #tpu.memory_space<vmem>>, %arg4: memref<512x512xbf16, #tpu.memory_space<vmem>>, %arg5: memref<1x512xf32, #tpu.memory_space<vmem>>, %arg6: memref<512x512xbf16, #tpu.memory_space<vmem>>, %arg7: memref<1x512xf32, #tpu.memory_space<vmem>>, %arg8: memref<512x128xbf16, #tpu.memory_space<vmem>>, %arg9: memref<1x128xf32, #tpu.memory_space<vmem>>, %arg10: memref<8x128xf32, #tpu.memory_space<vmem>>) attributes {dimension_semantics = [#tpu.dimension_semantics<parallel>], iteration_bounds = array<i64: 1>, scalar_prefetch = 0 : i64, scratch_operands = 0 : i64, tpu.core_type = #tpu.core_type<tc>, window_params = [{transform_indices = @transform_0, window_bounds = array<i64: 8, 8>}, {pipeline_mode = #tpu.pipeline_mode<synchronous>, transform_indices = @transform_1, window_bounds = array<i64: 8, 512>}, {pipeline_mode = #tpu.pipeline_mode<synchronous>, transform_indices = @transform_2, window_bounds = array<i64: 1, 512>}, {pipeline_mode = #tpu.pipeline_mode<synchronous>, transform_indices = @transform_3, window_bounds = array<i64: 512, 512>}, {pipeline_mode = #tpu.pipeline_mode<synchronous>, transform_indices = @transform_4, window_bounds = array<i64: 1, 512>}, {pipeline_mode = #tpu.pipeline_mode<synchronous>, transform_indices = @transform_5, window_bounds = array<i64: 512, 512>}, {pipeline_mode = #tpu.pipeline_mode<synchronous>, transform_indices = @transform_6, window_bounds = array<i64: 1, 512>}, {pipeline_mode = #tpu.pipeline_mode<synchronous>, transform_indices = @transform_7, window_bounds = array<i64: 512, 128>}, {pipeline_mode = #tpu.pipeline_mode<synchronous>, transform_indices = @transform_8, window_bounds = array<i64: 1, 128>}, {transform_indices = @transform_9, window_bounds = array<i64: 8, 128>}]} {
    %c0 = arith.constant 0 : index
    %c0_0 = arith.constant 0 : index
    %0 = vector.load %arg1[%c0, %c0_0] : memref<8x8xbf16, #tpu.memory_space<vmem>>, vector<8x8xbf16>
    %c0_1 = arith.constant 0 : index
    %c0_2 = arith.constant 0 : index
    %1 = vector.load %arg2[%c0_1, %c0_2] : memref<8x512xbf16, #tpu.memory_space<vmem>>, vector<8x512xbf16>
    %cst = arith.constant dense<0.000000e+00> : vector<8x512xf32>
    %2 = tpu.matmul %0, %1, %cst {dimension_numbers = #tpu.dot_dimension_numbers<[1], [0], [0], [1], [0, 0, 1, 1], [], []>} : vector<8x8xbf16>, vector<8x512xbf16>, vector<8x512xf32> -> vector<8x512xf32>
    %c0_3 = arith.constant 0 : index
    %c0_4 = arith.constant 0 : index
    %3 = vector.load %arg3[%c0_3, %c0_4] : memref<1x512xf32, #tpu.memory_space<vmem>>, vector<1x512xf32>
    %4 = vector.broadcast %3 : vector<1x512xf32> to vector<8x512xf32>
    %5 = arith.addf %2, %4 : vector<8x512xf32>
    %cst_5 = arith.constant 0.000000e+00 : f32
    %6 = vector.broadcast %cst_5 : f32 to vector<8x512xf32>
    %7 = arith.maximumf %5, %6 : vector<8x512xf32>
    %8 = arith.truncf %7 : vector<8x512xf32> to vector<8x512xbf16>
    %c0_6 = arith.constant 0 : index
    %c0_7 = arith.constant 0 : index
    %9 = vector.load %arg4[%c0_6, %c0_7] : memref<512x512xbf16, #tpu.memory_space<vmem>>, vector<512x512xbf16>
    %cst_8 = arith.constant dense<0.000000e+00> : vector<8x512xf32>
    %10 = tpu.matmul %8, %9, %cst_8 {dimension_numbers = #tpu.dot_dimension_numbers<[1], [0], [0], [1], [0, 0, 1, 1], [], []>} : vector<8x512xbf16>, vector<512x512xbf16>, vector<8x512xf32> -> vector<8x512xf32>
    %c0_9 = arith.constant 0 : index
    %c0_10 = arith.constant 0 : index
    %11 = vector.load %arg5[%c0_9, %c0_10] : memref<1x512xf32, #tpu.memory_space<vmem>>, vector<1x512xf32>
    %12 = vector.broadcast %11 : vector<1x512xf32> to vector<8x512xf32>
    %13 = arith.addf %10, %12 : vector<8x512xf32>
    %cst_11 = arith.constant 0.000000e+00 : f32
    %14 = vector.broadcast %cst_11 : f32 to vector<8x512xf32>
    %15 = arith.maximumf %13, %14 : vector<8x512xf32>
    %16 = arith.truncf %15 : vector<8x512xf32> to vector<8x512xbf16>
    %c0_12 = arith.constant 0 : index
    %c0_13 = arith.constant 0 : index
    %17 = vector.load %arg6[%c0_12, %c0_13] : memref<512x512xbf16, #tpu.memory_space<vmem>>, vector<512x512xbf16>
    %cst_14 = arith.constant dense<0.000000e+00> : vector<8x512xf32>
    %18 = tpu.matmul %16, %17, %cst_14 {dimension_numbers = #tpu.dot_dimension_numbers<[1], [0], [0], [1], [0, 0, 1, 1], [], []>} : vector<8x512xbf16>, vector<512x512xbf16>, vector<8x512xf32> -> vector<8x512xf32>
    %c0_15 = arith.constant 0 : index
    %c0_16 = arith.constant 0 : index
    %19 = vector.load %arg7[%c0_15, %c0_16] : memref<1x512xf32, #tpu.memory_space<vmem>>, vector<1x512xf32>
    %20 = vector.broadcast %19 : vector<1x512xf32> to vector<8x512xf32>
    %21 = arith.addf %18, %20 : vector<8x512xf32>
    %cst_17 = arith.constant 0.000000e+00 : f32
    %22 = vector.broadcast %cst_17 : f32 to vector<8x512xf32>
    %23 = arith.maximumf %21, %22 : vector<8x512xf32>
    %24 = arith.truncf %23 : vector<8x512xf32> to vector<8x512xbf16>
    %c0_18 = arith.constant 0 : index
    %c0_19 = arith.constant 0 : index
    %25 = vector.load %arg8[%c0_18, %c0_19] : memref<512x128xbf16, #tpu.memory_space<vmem>>, vector<512x128xbf16>
    %cst_20 = arith.constant dense<0.000000e+00> : vector<8x128xf32>
    %26 = tpu.matmul %24, %25, %cst_20 {dimension_numbers = #tpu.dot_dimension_numbers<[1], [0], [0], [1], [0, 0, 1, 1], [], []>} : vector<8x512xbf16>, vector<512x128xbf16>, vector<8x128xf32> -> vector<8x128xf32>
    %c0_21 = arith.constant 0 : index
    %c0_22 = arith.constant 0 : index
    %27 = vector.load %arg9[%c0_21, %c0_22] : memref<1x128xf32, #tpu.memory_space<vmem>>, vector<1x128xf32>
    %28 = vector.broadcast %27 : vector<1x128xf32> to vector<8x128xf32>
    %29 = arith.addf %26, %28 : vector<8x128xf32>
    %c0_23 = arith.constant 0 : index
    %c0_24 = arith.constant 0 : index
    %30 = vector.load %arg10[%c0_23, %c0_24] : memref<8x128xf32, #tpu.memory_space<vmem>>, vector<8x128xf32>
    tpu.vector_store %arg10[%c0_23, %c0_24], %29 {strides = array<i32>} : memref<8x128xf32, #tpu.memory_space<vmem>>, vector<8x128xf32>,
    return
  }
  func.func @transform_0(%arg0: i32) -> (i32, i32) {
    %c0_i32 = arith.constant 0 : i32
    %c0_i32_0 = arith.constant 0 : i32
    return %arg0, %c0_i32 : i32, i32
  }
  func.func @transform_1(%arg0: i32) -> (i32, i32) {
    %c0_i32 = arith.constant 0 : i32
    %c0_i32_0 = arith.constant 0 : i32
    %c0_i32_1 = arith.constant 0 : i32
    return %c0_i32, %c0_i32_0 : i32, i32
  }
  func.func @transform_2(%arg0: i32) -> (i32, i32) {
    %c0_i32 = arith.constant 0 : i32
    %c0_i32_0 = arith.constant 0 : i32
    %c0_i32_1 = arith.constant 0 : i32
    return %c0_i32, %c0_i32_0 : i32, i32
  }
  func.func @transform_3(%arg0: i32) -> (i32, i32) {
    %c0_i32 = arith.constant 0 : i32
    %c0_i32_0 = arith.constant 0 : i32
    %c0_i32_1 = arith.constant 0 : i32
    return %c0_i32, %c0_i32_0 : i32, i32
  }
  func.func @transform_4(%arg0: i32) -> (i32, i32) {
    %c0_i32 = arith.constant 0 : i32
    %c0_i32_0 = arith.constant 0 : i32
    %c0_i32_1 = arith.constant 0 : i32
    return %c0_i32, %c0_i32_0 : i32, i32
  }
  func.func @transform_5(%arg0: i32) -> (i32, i32) {
    %c0_i32 = arith.constant 0 : i32
    %c0_i32_0 = arith.constant 0 : i32
    %c0_i32_1 = arith.constant 0 : i32
    return %c0_i32, %c0_i32_0 : i32, i32
  }
  func.func @transform_6(%arg0: i32) -> (i32, i32) {
    %c0_i32 = arith.constant 0 : i32
    %c0_i32_0 = arith.constant 0 : i32
    %c0_i32_1 = arith.constant 0 : i32
    return %c0_i32, %c0_i32_0 : i32, i32
  }
  func.func @transform_7(%arg0: i32) -> (i32, i32) {
    %c0_i32 = arith.constant 0 : i32
    %c0_i32_0 = arith.constant 0 : i32
    %c0_i32_1 = arith.constant 0 : i32
    return %c0_i32, %c0_i32_0 : i32, i32
  }
  func.func @transform_8(%arg0: i32) -> (i32, i32) {
    %c0_i32 = arith.constant 0 : i32
    %c0_i32_0 = arith.constant 0 : i32
    %c0_i32_1 = arith.constant 0 : i32
    return %c0_i32, %c0_i32_0 : i32, i32
  }
  func.func @transform_9(%arg0: i32) -> (i32, i32) {
    %c0_i32 = arith.constant 0 : i32
    %c0_i32_0 = arith.constant 0 : i32
    return %arg0, %c0_i32 : i32, i32
  }
}

</mosaic_0001>

<llo_original>
// kernel: model_forward.1
$region0: #{model_forward.1}
  #allocation0 [shape = 'u32[]', space=smem, size = 0x4, offset = 0x4, fixed_abs, tag = 'smem constant byte address 0x4 - core index']
  #allocation1 [shape = 'u32[72,128]{1,0:T(1,128)}', space=vmem, size = 0x9000, scoped, tag = 'internal scratch']
  %s0 = inlined_call_operand.vmem [shape: bf16[8,8], index: 0, kind: input, shape index: {}]
  %s1 = inlined_call_operand.vmem [shape: bf16[8,512], index: 1, kind: input, shape index: {}]
  %s2 = inlined_call_operand.vmem [shape: f32[1,512], index: 2, kind: input, shape index: {}]
  %s3 = inlined_call_operand.vmem [shape: bf16[512,512], index: 3, kind: input, shape index: {}]
  %s4 = inlined_call_operand.vmem [shape: f32[1,512], index: 4, kind: input, shape index: {}]
  %s5 = inlined_call_operand.vmem [shape: bf16[512,512], index: 5, kind: input, shape index: {}]
  %s6 = inlined_call_operand.vmem [shape: f32[1,512], index: 6, kind: input, shape index: {}]
  %s7 = inlined_call_operand.vmem [shape: bf16[512,128], index: 7, kind: input, shape index: {}]
  %s8 = inlined_call_operand.vmem [shape: f32[1,128], index: 8, kind: input, shape index: {}]
  %s9 = inlined_call_operand.vmem [shape: f32[8,128], index: 9, kind: output, shape index: {}]
  %s10 = sld [smem:[#allocation0]]
  $region46: #{model_forward.1} parent=0
    _
  %s12 = ssub.s32 1, %s10
  %s13 = scalar_select 0, %s12, %s10
  // Predicated region
  $region2: #{model_forward.1} parent=0 // pred_check
    _
  $region3: #{model_forward.1} parent=0 // pred_check_branch
    %15 = sbr.rel (0) target = $region5
  $region4: #{model_forward.1} parent=0 // pred_region
    _
  $region5: #{model_forward.1} parent=0 // pred_fallthru
    _
  // Predicated region
  $region6: #{model_forward.1} parent=0 // pred_check
    _
  $region7: #{model_forward.1} parent=0 // pred_check_branch
    %17 = sbr.rel (0) target = $region9
  $region8: #{model_forward.1} parent=0 // pred_region
    _
  $region9: #{model_forward.1} parent=0 // pred_fallthru
    _
  // Predicated region
  $region10: #{model_forward.1} parent=0 // pred_check
    _
  $region11: #{model_forward.1} parent=0 // pred_check_branch
    %19 = sbr.rel (0) target = $region13
  $region12: #{model_forward.1} parent=0 // pred_region
    _
  $region13: #{model_forward.1} parent=0 // pred_fallthru
    _
  // Predicated region
  $region14: #{model_forward.1} parent=0 // pred_check
    _
  $region15: #{model_forward.1} parent=0 // pred_check_branch
    %21 = sbr.rel (0) target = $region17
  $region16: #{model_forward.1} parent=0 // pred_region
    _
  $region17: #{model_forward.1} parent=0 // pred_fallthru
    _
  // Predicated region
  $region18: #{model_forward.1} parent=0 // pred_check
    _
  $region19: #{model_forward.1} parent=0 // pred_check_branch
    %23 = sbr.rel (0) target = $region21
  $region20: #{model_forward.1} parent=0 // pred_region
    _
  $region21: #{model_forward.1} parent=0 // pred_fallthru
    _
  // Predicated region
  $region22: #{model_forward.1} parent=0 // pred_check
    _
  $region23: #{model_forward.1} parent=0 // pred_check_branch
    %25 = sbr.rel (0) target = $region25
  $region24: #{model_forward.1} parent=0 // pred_region
    _
  $region25: #{model_forward.1} parent=0 // pred_fallthru
    _
  // Predicated region
  $region26: #{model_forward.1} parent=0 // pred_check
    _
  $region27: #{model_forward.1} parent=0 // pred_check_branch
    %27 = sbr.rel (0) target = $region29
  $region28: #{model_forward.1} parent=0 // pred_region
    _
  $region29: #{model_forward.1} parent=0 // pred_fallthru
    _
  // Predicated region
  $region30: #{model_forward.1} parent=0 // pred_check
    _
  $region31: #{model_forward.1} parent=0 // pred_check_branch
    %29 = sbr.rel (0) target = $region33
  $region32: #{model_forward.1} parent=0 // pred_region
    _
  $region33: #{model_forward.1} parent=0 // pred_fallthru
    _
  // Predicated region
  $region34: #{model_forward.1} parent=0 // pred_check
    _
  $region35: #{model_forward.1} parent=0 // pred_check_branch
    %31 = sbr.rel (0) target = $region37
  $region36: #{model_forward.1} parent=0 // pred_region
    _
  $region37: #{model_forward.1} parent=0 // pred_fallthru
    _
  %v33 = vld [vmem:[%s0] sm:$0xf]
  %v34 = vld [vmem:[%s1] sm:$0xff]
  %v35 = vld [vmem:[%s1 + $0x8] sm:$0xff]
  %v36 = vld [vmem:[%s2] sm:$0xf]
  %v38 = vperm.slane %v36, 0
  %v39 = vperm.slane %v36, 1
  %v40 = vperm.slane %v36, 2
  %v41 = vperm.slane %v36, 3
  %v48 = vunpack.c.l.b16 %v34
  %v49 = vunpack.c.h.b16 %v34
  %v50 = vunpack.c.l.b16 %v35
  %v51 = vunpack.c.h.b16 %v35
  %v52 = vpack.c.b16 %v48, %v48
  %v53 = vpack.c.b16 %v49, %v49
  %v54 = vpack.c.b16 %v50, %v50
  %v55 = vpack.c.b16 %v51, %v51
  %vm56 = vcmask 64512
  %v58 = vsel %vm56, %v33, 0
  %vm60 = vcmask 1043456
  %v62 = vsel %vm60, %v52, 0
  %v65 = vsel %vm60, %v53, 0
  %v68 = vsel %vm60, %v54, 0
  %v71 = vsel %vm60, %v55, 0
  %73 = vmatpush.bf16.msra.mxu0 0
  %74 = vmatpush.bf16.msra.mxu0 0
  %75 = vmatpush.bf16.msra.mxu0 0
  %76 = vmatpush.bf16.msra.mxu0 0
  %77 = vmatpush.bf16.msra.mxu0 0
  %78 = vmatpush.bf16.msra.mxu0 0
  %79 = vmatpush.bf16.msra.mxu0 0
  %80 = vmatpush.bf16.msra.mxu0 %v62
  %81 = vmatmul.bf16.gmra.mxu0 %v58
  %v82 = vpop.f32.mrf.mxu0
  %v83 = vadd.f32 %v38, %v82
  %v84 = vpop.f32.mrf.mxu0
  %85 = vdwg.mxu0
  %86 = vmatpush.bf16.msra.mxu0 0
  %87 = vmatpush.bf16.msra.mxu0 0
  %88 = vmatpush.bf16.msra.mxu0 0
  %89 = vmatpush.bf16.msra.mxu0 0
  %90 = vmatpush.bf16.msra.mxu0 0
  %91 = vmatpush.bf16.msra.mxu0 0
  %92 = vmatpush.bf16.msra.mxu0 0
  %93 = vmatpush.bf16.msra.mxu0 %v65
  %94 = vmatmul.bf16.gmra.mxu0 %v58
  %v95 = vpop.f32.mrf.mxu0
  %v96 = vadd.f32 %v39, %v95
  %v97 = vpop.f32.mrf.mxu0
  %98 = vdwg.mxu0
  %99 = vmatpush.bf16.msra.mxu0 0
  %100 = vmatpush.bf16.msra.mxu0 0
  %101 = vmatpush.bf16.msra.mxu0 0
  %102 = vmatpush.bf16.msra.mxu0 0
  %103 = vmatpush.bf16.msra.mxu0 0
  %104 = vmatpush.bf16.msra.mxu0 0
  %105 = vmatpush.bf16.msra.mxu0 0
  %106 = vmatpush.bf16.msra.mxu0 %v68
  %107 = vmatmul.bf16.gmra.mxu0 %v58
  %v108 = vpop.f32.mrf.mxu0
  %v109 = vadd.f32 %v40, %v108
  %v110 = vpop.f32.mrf.mxu0
  %111 = vdwg.mxu0
  %112 = vmatpush.bf16.msra.mxu0 0
  %113 = vmatpush.bf16.msra.mxu0 0
  %114 = vmatpush.bf16.msra.mxu0 0
  %115 = vmatpush.bf16.msra.mxu0 0
  %116 = vmatpush.bf16.msra.mxu0 0
  %117 = vmatpush.bf16.msra.mxu0 0
  %118 = vmatpush.bf16.msra.mxu0 0
  %119 = vmatpush.bf16.msra.mxu0 %v71
  %120 = vmatmul.bf16.gmra.mxu0 %v58
  %v121 = vpop.f32.mrf.mxu0
  %v122 = vadd.f32 %v41, %v121
  %v123 = vpop.f32.mrf.mxu0
  %124 = vdwg.mxu0
  %v125 = vmax.f32 %v83, 0.0
  %v126 = vmax.f32 %v96, 0.0
  %v127 = vmax.f32 %v109, 0.0
  %v128 = vmax.f32 %v122, 0.0
  %v129 = vpack.c.bf16 %v125, %v125
  %v130 = vpack.c.bf16 %v126, %v126
  %v131 = vpack.c.bf16 %v127, %v127
  %v132 = vpack.c.bf16 %v128, %v128
  %v133 = vld [vmem:[%s3] sm:$0xff]
  %v134 = vld [vmem:[%s3 + $0x8] sm:$0xff]
  %v135 = vld [vmem:[%s3 + $0x10] sm:$0xff]
  %v136 = vld [vmem:[%s3 + $0x18] sm:$0xff]
  %v137 = vld [vmem:[%s3 + $0x20] sm:$0xff]
  %v138 = vld [vmem:[%s3 + $0x28] sm:$0xff]
  %v139 = vld [vmem:[%s3 + $0x30] sm:$0xff]
  %v140 = vld [vmem:[%s3 + $0x38] sm:$0xff]
  %v141 = vld [vmem:[%s3 + $0x40] sm:$0xff]
  %v142 = vld [vmem:[%s3 + $0x48] sm:$0xff]
  %v143 = vld [vmem:[%s3 + $0x50] sm:$0xff]
  %v144 = vld [vmem:[%s3 + $0x58] sm:$0xff]
  %v145 = vld [vmem:[%s3 + $0x60] sm:$0xff]
  %v146 = vld [vmem:[%s3 + $0x68] sm:$0xff]
  %v147 = vld [vmem:[%s3 + $0x70] sm:$0xff]
  %v148 = vld [vmem:[%s3 + $0x78] sm:$0xff]
  %v149 = vld [vmem:[%s3 + $0x80] sm:$0xff]
  %v150 = vld [vmem:[%s3 + $0x88] sm:$0xff]
  %v151 = vld [vmem:[%s3 + $0x90] sm:$0xff]
  %v152 = vld [vmem:[%s3 + $0x98] sm:$0xff]
  %v153 = vld [vmem:[%s3 + $0xa0] sm:$0xff]
  %v154 = vld [vmem:[%s3 + $0xa8] sm:$0xff]
  %v155 = vld [vmem:[%s3 + $0xb0] sm:$0xff]
  %v156 = vld [vmem:[%s3 + $0xb8] sm:$0xff]
  %v157 = vld [vmem:[%s3 + $0xc0] sm:$0xff]
  %v158 = vld [vmem:[%s3 + $0xc8] sm:$0xff]
  %v159 = vld [vmem:[%s3 + $0xd0] sm:$0xff]
  %v160 = vld [vmem:[%s3 + $0xd8] sm:$0xff]
  %v161 = vld [vmem:[%s3 + $0xe0] sm:$0xff]
  %v162 = vld [vmem:[%s3 + $0xe8] sm:$0xff]
  %v163 = vld [vmem:[%s3 + $0xf0] sm:$0xff]
  %v164 = vld [vmem:[%s3 + $0xf8] sm:$0xff]
  %v165 = vld [vmem:[%s3 + $0x100] sm:$0xff]
  %v166 = vld [vmem:[%s3 + $0x108] sm:$0xff]
  %v167 = vld [vmem:[%s3 + $0x110] sm:$0xff]
  %v168 = vld [vmem:[%s3 + $0x118] sm:$0xff]
  %v169 = vld [vmem:[%s3 + $0x120] sm:$0xff]
  %v170 = vld [vmem:[%s3 + $0x128] sm:$0xff]
  %v171 = vld [vmem:[%s3 + $0x130] sm:$0xff]
  %v172 = vld [vmem:[%s3 + $0x138] sm:$0xff]
  %v173 = vld [vmem:[%s3 + $0x140] sm:$0xff]
  %v174 = vld [vmem:[%s3 + $0x148] sm:$0xff]
  %v175 = vld [vmem:[%s3 + $0x150] sm:$0xff]
  %v176 = vld [vmem:[%s3 + $0x158] sm:$0xff]
  %v177 = vld [vmem:[%s3 + $0x160] sm:$0xff]
  %v178 = vld [vmem:[%s3 + $0x168] sm:$0xff]
  %v179 = vld [vmem:[%s3 + $0x170] sm:$0xff]
  %v180 = vld [vmem:[%s3 + $0x178] sm:$0xff]
  %v181 = vld [vmem:[%s3 + $0x180] sm:$0xff]
  %v182 = vld [vmem:[%s3 + $0x188] sm:$0xff]
  %v183 = vld [vmem:[%s3 + $0x190] sm:$0xff]
  %v184 = vld [vmem:[%s3 + $0x198] sm:$0xff]
  %v185 = vld [vmem:[%s3 + $0x1a0] sm:$0xff]
  %v186 = vld [vmem:[%s3 + $0x1a8] sm:$0xff]
  %v187 = vld [vmem:[%s3 + $0x1b0] sm:$0xff]
  %v188 = vld [vmem:[%s3 + $0x1b8] sm:$0xff]
  %v189 = vld [vmem:[%s3 + $0x1c0] sm:$0xff]
  %v190 = vld [vmem:[%s3 + $0x1c8] sm:$0xff]
  %v191 = vld [vmem:[%s3 + $0x1d0] sm:$0xff]
  %v192 = vld [vmem:[%s3 + $0x1d8] sm:$0xff]
  %v193 = vld [vmem:[%s3 + $0x1e0] sm:$0xff]
  %v194 = vld [vmem:[%s3 + $0x1e8] sm:$0xff]
  %v195 = vld [vmem:[%s3 + $0x1f0] sm:$0xff]
  %v196 = vld [vmem:[%s3 + $0x1f8] sm:$0xff]
  %v197 = vld [vmem:[%s3 + $0x200] sm:$0xff]
  %v198 = vld [vmem:[%s3 + $0x208] sm:$0xff]
  %v199 = vld [vmem:[%s3 + $0x210] sm:$0xff]
  %v200 = vld [vmem:[%s3 + $0x218] sm:$0xff]
  %v201 = vld [vmem:[%s3 + $0x220] sm:$0xff]
  %v202 = vld [vmem:[%s3 + $0x228] sm:$0xff]
  %v203 = vld [vmem:[%s3 + $0x230] sm:$0xff]
  %v204 = vld [vmem:[%s3 + $0x238] sm:$0xff]
  %v205 = vld [vmem:[%s3 + $0x240] sm:$0xff]
  %v206 = vld [vmem:[%s3 + $0x248] sm:$0xff]
  %v207 = vld [vmem:[%s3 + $0x250] sm:$0xff]
  %v208 = vld [vmem:[%s3 + $0x258] sm:$0xff]
  %v209 = vld [vmem:[%s3 + $0x260] sm:$0xff]
  %v210 = vld [vmem:[%s3 + $0x268] sm:$0xff]
  %v211 = vld [vmem:[%s3 + $0x270] sm:$0xff]
  %v212 = vld [vmem:[%s3 + $0x278] sm:$0xff]
  %v213 = vld [vmem:[%s3 + $0x280] sm:$0xff]
  %v214 = vld [vmem:[%s3 + $0x288] sm:$0xff]
  %v215 = vld [vmem:[%s3 + $0x290] sm:$0xff]
  %v216 = vld [vmem:[%s3 + $0x298] sm:$0xff]
  %v217 = vld [vmem:[%s3 + $0x2a0] sm:$0xff]
  %v218 = vld [vmem:[%s3 + $0x2a8] sm:$0xff]
  %v219 = vld [vmem:[%s3 + $0x2b0] sm:$0xff]
  %v220 = vld [vmem:[%s3 + $0x2b8] sm:$0xff]
  %v221 = vld [vmem:[%s3 + $0x2c0] sm:$0xff]
  %v222 = vld [vmem:[%s3 + $0x2c8] sm:$0xff]
  %v223 = vld [vmem:[%s3 + $0x2d0] sm:$0xff]
  %v224 = vld [vmem:[%s3 + $0x2d8] sm:$0xff]
  %v225 = vld [vmem:[%s3 + $0x2e0] sm:$0xff]
  %v226 = vld [vmem:[%s3 + $0x2e8] sm:$0xff]
  %v227 = vld [vmem:[%s3 + $0x2f0] sm:$0xff]
  %v228 = vld [vmem:[%s3 + $0x2f8] sm:$0xff]
  %v229 = vld [vmem:[%s3 + $0x300] sm:$0xff]
  %v230 = vld [vmem:[%s3 + $0x308] sm:$0xff]
  %v231 = vld [vmem:[%s3 + $0x310] sm:$0xff]
  %v232 = vld [vmem:[%s3 + $0x318] sm:$0xff]
  %v233 = vld [vmem:[%s3 + $0x320] sm:$0xff]
  %v234 = vld [vmem:[%s3 + $0x328] sm:$0xff]
  %v235 = vld [vmem:[%s3 + $0x330] sm:$0xff]
  %v236 = vld [vmem:[%s3 + $0x338] sm:$0xff]
  %v237 = vld [vmem:[%s3 + $0x340] sm:$0xff]
  %v238 = vld [vmem:[%s3 + $0x348] sm:$0xff]
  %v239 = vld [vmem:[%s3 + $0x350] sm:$0xff]
  %v240 = vld [vmem:[%s3 + $0x358] sm:$0xff]
  %v241 = vld [vmem:[%s3 + $0x360] sm:$0xff]
  %v242 = vld [vmem:[%s3 + $0x368] sm:$0xff]
  %v243 = vld [vmem:[%s3 + $0x370] sm:$0xff]
  %v244 = vld [vmem:[%s3 + $0x378] sm:$0xff]
  %v245 = vld [vmem:[%s3 + $0x380] sm:$0xff]
  %v246 = vld [vmem:[%s3 + $0x388] sm:$0xff]
  %v247 = vld [vmem:[%s3 + $0x390] sm:$0xff]
  %v248 = vld [vmem:[%s3 + $0x398] sm:$0xff]
  %v249 = vld [vmem:[%s3 + $0x3a0] sm:$0xff]
  %v250 = vld [vmem:[%s3 + $0x3a8] sm:$0xff]
  %v251 = vld [vmem:[%s3 + $0x3b0] sm:$0xff]
  %v252 = vld [vmem:[%s3 + $0x3b8] sm:$0xff]
  %v253 = vld [vmem:[%s3 + $0x3c0] sm:$0xff]
  %v254 = vld [vmem:[%s3 + $0x3c8] sm:$0xff]
  %v255 = vld [vmem:[%s3 + $0x3d0] sm:$0xff]
  %v256 = vld [vmem:[%s3 + $0x3d8] sm:$0xff]
  %v257 = vld [vmem:[%s3 + $0x3e0] sm:$0xff]
  %v258 = vld [vmem:[%s3 + $0x3e8] sm:$0xff]
  %v259 = vld [vmem:[%s3 + $0x3f0] sm:$0xff]
  %v260 = vld [vmem:[%s3 + $0x3f8] sm:$0xff]
  %v261 = vld [vmem:[%s4] sm:$0xf]
  %v263 = vperm.slane %v261, 0
  %v264 = vperm.slane %v261, 1
  %v265 = vperm.slane %v261, 2
  %v266 = vperm.slane %v261, 3
  %v399 = vunpack.c.l.b16 %v133
  %v400 = vunpack.c.h.b16 %v133
  %v401 = vunpack.c.l.b16 %v134
  %v402 = vunpack.c.h.b16 %v134
  %v403 = vunpack.c.l.b16 %v135
  %v404 = vunpack.c.h.b16 %v135
  %v405 = vunpack.c.l.b16 %v136
  %v406 = vunpack.c.h.b16 %v136
  %v407 = vunpack.c.l.b16 %v137
  %v408 = vunpack.c.h.b16 %v137
  %v409 = vunpack.c.l.b16 %v138
  %v410 = vunpack.c.h.b16 %v138
  %v411 = vunpack.c.l.b16 %v139
  %v412 = vunpack.c.h.b16 %v139
  %v413 = vunpack.c.l.b16 %v140
  %v414 = vunpack.c.h.b16 %v140
  %v415 = vunpack.c.l.b16 %v141
  %v416 = vunpack.c.h.b16 %v141
  %v417 = vunpack.c.l.b16 %v142
  %v418 = vunpack.c.h.b16 %v142
  %v419 = vunpack.c.l.b16 %v143
  %v420 = vunpack.c.h.b16 %v143
  %v421 = vunpack.c.l.b16 %v144
  %v422 = vunpack.c.h.b16 %v144
  %v423 = vunpack.c.l.b16 %v145
  %v424 = vunpack.c.h.b16 %v145
  %v425 = vunpack.c.l.b16 %v146
  %v426 = vunpack.c.h.b16 %v146
  %v427 = vunpack.c.l.b16 %v147
  %v428 = vunpack.c.h.b16 %v147
  %v429 = vunpack.c.l.b16 %v148
  %v430 = vunpack.c.h.b16 %v148
  %v431 = vunpack.c.l.b16 %v149
  %v432 = vunpack.c.h.b16 %v149
  %v433 = vunpack.c.l.b16 %v150
  %v434 = vunpack.c.h.b16 %v150
  %v435 = vunpack.c.l.b16 %v151
  %v436 = vunpack.c.h.b16 %v151
  %v437 = vunpack.c.l.b16 %v152
  %v438 = vunpack.c.h.b16 %v152
  %v439 = vunpack.c.l.b16 %v153
  %v440 = vunpack.c.h.b16 %v153
  %v441 = vunpack.c.l.b16 %v154
  %v442 = vunpack.c.h.b16 %v154
  %v443 = vunpack.c.l.b16 %v155
  %v444 = vunpack.c.h.b16 %v155
  %v445 = vunpack.c.l.b16 %v156
  %v446 = vunpack.c.h.b16 %v156
  %v447 = vunpack.c.l.b16 %v157
  %v448 = vunpack.c.h.b16 %v157
  %v449 = vunpack.c.l.b16 %v158
  %v450 = vunpack.c.h.b16 %v158
  %v451 = vunpack.c.l.b16 %v159
  %v452 = vunpack.c.h.b16 %v159
  %v453 = vunpack.c.l.b16 %v160
  %v454 = vunpack.c.h.b16 %v160
  %v455 = vunpack.c.l.b16 %v161
  %v456 = vunpack.c.h.b16 %v161
  %v457 = vunpack.c.l.b16 %v162
  %v458 = vunpack.c.h.b16 %v162
  %v459 = vunpack.c.l.b16 %v163
  %v460 = vunpack.c.h.b16 %v163
  %v461 = vunpack.c.l.b16 %v164
  %v462 = vunpack.c.h.b16 %v164
  %v463 = vunpack.c.l.b16 %v165
  %v464 = vunpack.c.h.b16 %v165
  %v465 = vunpack.c.l.b16 %v166
  %v466 = vunpack.c.h.b16 %v166
  %v467 = vunpack.c.l.b16 %v167
  %v468 = vunpack.c.h.b16 %v167
  %v469 = vunpack.c.l.b16 %v168
  %v470 = vunpack.c.h.b16 %v168
  %v471 = vunpack.c.l.b16 %v169
  %v472 = vunpack.c.h.b16 %v169
  %v473 = vunpack.c.l.b16 %v170
  %v474 = vunpack.c.h.b16 %v170
  %v475 = vunpack.c.l.b16 %v171
  %v476 = vunpack.c.h.b16 %v171
  %v477 = vunpack.c.l.b16 %v172
  %v478 = vunpack.c.h.b16 %v172
  %v479 = vunpack.c.l.b16 %v173
  %v480 = vunpack.c.h.b16 %v173
  %v481 = vunpack.c.l.b16 %v174
  %v482 = vunpack.c.h.b16 %v174
  %v483 = vunpack.c.l.b16 %v175
  %v484 = vunpack.c.h.b16 %v175
  %v485 = vunpack.c.l.b16 %v176
  %v486 = vunpack.c.h.b16 %v176
  %v487 = vunpack.c.l.b16 %v177
  %v488 = vunpack.c.h.b16 %v177
  %v489 = vunpack.c.l.b16 %v178
  %v490 = vunpack.c.h.b16 %v178
  %v491 = vunpack.c.l.b16 %v179
  %v492 = vunpack.c.h.b16 %v179
  %v493 = vunpack.c.l.b16 %v180
  %v494 = vunpack.c.h.b16 %v180
  %v495 = vunpack.c.l.b16 %v181
  %v496 = vunpack.c.h.b16 %v181
  %v497 = vunpack.c.l.b16 %v182
  %v498 = vunpack.c.h.b16 %v182
  %v499 = vunpack.c.l.b16 %v183
  %v500 = vunpack.c.h.b16 %v183
  %v501 = vunpack.c.l.b16 %v184
  %v502 = vunpack.c.h.b16 %v184
  %v503 = vunpack.c.l.b16 %v185
  %v504 = vunpack.c.h.b16 %v185
  %v505 = vunpack.c.l.b16 %v186
  %v506 = vunpack.c.h.b16 %v186
  %v507 = vunpack.c.l.b16 %v187
  %v508 = vunpack.c.h.b16 %v187
  %v509 = vunpack.c.l.b16 %v188
  %v510 = vunpack.c.h.b16 %v188
  %v511 = vunpack.c.l.b16 %v189
  %v512 = vunpack.c.h.b16 %v189
  %v513 = vunpack.c.l.b16 %v190
  %v514 = vunpack.c.h.b16 %v190
  %v515 = vunpack.c.l.b16 %v191
  %v516 = vunpack.c.h.b16 %v191
  %v517 = vunpack.c.l.b16 %v192
  %v518 = vunpack.c.h.b16 %v192
  %v519 = vunpack.c.l.b16 %v193
  %v520 = vunpack.c.h.b16 %v193
  %v521 = vunpack.c.l.b16 %v194
  %v522 = vunpack.c.h.b16 %v194
  %v523 = vunpack.c.l.b16 %v195
  %v524 = vunpack.c.h.b16 %v195
  %v525 = vunpack.c.l.b16 %v196
  %v526 = vunpack.c.h.b16 %v196
  %v527 = vunpack.c.l.b16 %v197
  %v528 = vunpack.c.h.b16 %v197
  %v529 = vunpack.c.l.b16 %v198
  %v530 = vunpack.c.h.b16 %v198
  %v531 = vunpack.c.l.b16 %v199
  %v532 = vunpack.c.h.b16 %v199
  %v533 = vunpack.c.l.b16 %v200
  %v534 = vunpack.c.h.b16 %v200
  %v535 = vunpack.c.l.b16 %v201
  %v536 = vunpack.c.h.b16 %v201
  %v537 = vunpack.c.l.b16 %v202
  %v538 = vunpack.c.h.b16 %v202
  %v539 = vunpack.c.l.b16 %v203
  %v540 = vunpack.c.h.b16 %v203
  %v541 = vunpack.c.l.b16 %v204
  %v542 = vunpack.c.h.b16 %v204
  %v543 = vunpack.c.l.b16 %v205
  %v544 = vunpack.c.h.b16 %v205
  %v545 = vunpack.c.l.b16 %v206
  %v546 = vunpack.c.h.b16 %v206
  %v547 = vunpack.c.l.b16 %v207
  %v548 = vunpack.c.h.b16 %v207
  %v549 = vunpack.c.l.b16 %v208
  %v550 = vunpack.c.h.b16 %v208
  %v551 = vunpack.c.l.b16 %v209
  %v552 = vunpack.c.h.b16 %v209
  %v553 = vunpack.c.l.b16 %v210
  %v554 = vunpack.c.h.b16 %v210
  %v555 = vunpack.c.l.b16 %v211
  %v556 = vunpack.c.h.b16 %v211
  %v557 = vunpack.c.l.b16 %v212
  %v558 = vunpack.c.h.b16 %v212
  %v559 = vunpack.c.l.b16 %v213
  %v560 = vunpack.c.h.b16 %v213
  %v561 = vunpack.c.l.b16 %v214
  %v562 = vunpack.c.h.b16 %v214
  %v563 = vunpack.c.l.b16 %v215
  %v564 = vunpack.c.h.b16 %v215
  %v565 = vunpack.c.l.b16 %v216
  %v566 = vunpack.c.h.b16 %v216
  %v567 = vunpack.c.l.b16 %v217
  %v568 = vunpack.c.h.b16 %v217
  %v569 = vunpack.c.l.b16 %v218
  %v570 = vunpack.c.h.b16 %v218
  %v571 = vunpack.c.l.b16 %v219
  %v572 = vunpack.c.h.b16 %v219
  %v573 = vunpack.c.l.b16 %v220
  %v574 = vunpack.c.h.b16 %v220
  %v575 = vunpack.c.l.b16 %v221
  %v576 = vunpack.c.h.b16 %v221
  %v577 = vunpack.c.l.b16 %v222
  %v578 = vunpack.c.h.b16 %v222
  %v579 = vunpack.c.l.b16 %v223
  %v580 = vunpack.c.h.b16 %v223
  %v581 = vunpack.c.l.b16 %v224
  %v582 = vunpack.c.h.b16 %v224
  %v583 = vunpack.c.l.b16 %v225
  %v584 = vunpack.c.h.b16 %v225
  %v585 = vunpack.c.l.b16 %v226
  %v586 = vunpack.c.h.b16 %v226
  %v587 = vunpack.c.l.b16 %v227
  %v588 = vunpack.c.h.b16 %v227
  %v589 = vunpack.c.l.b16 %v228
  %v590 = vunpack.c.h.b16 %v228
  %v591 = vunpack.c.l.b16 %v229
  %v592 = vunpack.c.h.b16 %v229
  %v593 = vunpack.c.l.b16 %v230
  %v594 = vunpack.c.h.b16 %v230
  %v595 = vunpack.c.l.b16 %v231
  %v596 = vunpack.c.h.b16 %v231
  %v597 = vunpack.c.l.b16 %v232
  %v598 = vunpack.c.h.b16 %v232
  %v599 = vunpack.c.l.b16 %v233
  %v600 = vunpack.c.h.b16 %v233
  %v601 = vunpack.c.l.b16 %v234
  %v602 = vunpack.c.h.b16 %v234
  %v603 = vunpack.c.l.b16 %v235
  %v604 = vunpack.c.h.b16 %v235
  %v605 = vunpack.c.l.b16 %v236
  %v606 = vunpack.c.h.b16 %v236
  %v607 = vunpack.c.l.b16 %v237
  %v608 = vunpack.c.h.b16 %v237
  %v609 = vunpack.c.l.b16 %v238
  %v610 = vunpack.c.h.b16 %v238
  %v611 = vunpack.c.l.b16 %v239
  %v612 = vunpack.c.h.b16 %v239
  %v613 = vunpack.c.l.b16 %v240
  %v614 = vunpack.c.h.b16 %v240
  %v615 = vunpack.c.l.b16 %v241
  %v616 = vunpack.c.h.b16 %v241
  %v617 = vunpack.c.l.b16 %v242
  %v618 = vunpack.c.h.b16 %v242
  %v619 = vunpack.c.l.b16 %v243
  %v620 = vunpack.c.h.b16 %v243
  %v621 = vunpack.c.l.b16 %v244
  %v622 = vunpack.c.h.b16 %v244
  %v623 = vunpack.c.l.b16 %v245
  %v624 = vunpack.c.h.b16 %v245
  %v625 = vunpack.c.l.b16 %v246
  %v626 = vunpack.c.h.b16 %v246
  %v627 = vunpack.c.l.b16 %v247
  %v628 = vunpack.c.h.b16 %v247
  %v629 = vunpack.c.l.b16 %v248
  %v630 = vunpack.c.h.b16 %v248
  %v631 = vunpack.c.l.b16 %v249
  %v632 = vunpack.c.h.b16 %v249
  %v633 = vunpack.c.l.b16 %v250
  %v634 = vunpack.c.h.b16 %v250
  %v635 = vunpack.c.l.b16 %v251
  %v636 = vunpack.c.h.b16 %v251
  %v637 = vunpack.c.l.b16 %v252
  %v638 = vunpack.c.h.b16 %v252
  %v639 = vunpack.c.l.b16 %v253
  %v640 = vunpack.c.h.b16 %v253
  %v641 = vunpack.c.l.b16 %v254
  %v642 = vunpack.c.h.b16 %v254
  %v643 = vunpack.c.l.b16 %v255
  %v644 = vunpack.c.h.b16 %v255
  %v645 = vunpack.c.l.b16 %v256
  %v646 = vunpack.c.h.b16 %v256
  %v647 = vunpack.c.l.b16 %v257
  %v648 = vunpack.c.h.b16 %v257
  %v649 = vunpack.c.l.b16 %v258
  %v650 = vunpack.c.h.b16 %v258
  %v651 = vunpack.c.l.b16 %v259
  %v652 = vunpack.c.h.b16 %v259
  %v653 = vunpack.c.l.b16 %v260
  %v654 = vunpack.c.h.b16 %v260
  %v655 = vpack.c.b16 %v403, %v399
  %v656 = vpack.c.b16 %v404, %v400
  %v657 = vpack.c.b16 %v405, %v401
  %v658 = vpack.c.b16 %v406, %v402
  %v659 = vpack.c.b16 %v411, %v407
  %v660 = vpack.c.b16 %v412, %v408
  %v661 = vpack.c.b16 %v413, %v409
  %v662 = vpack.c.b16 %v414, %v410
  %v663 = vpack.c.b16 %v419, %v415
  %v664 = vpack.c.b16 %v420, %v416
  %v665 = vpack.c.b16 %v421, %v417
  %v666 = vpack.c.b16 %v422, %v418
  %v667 = vpack.c.b16 %v427, %v423
  %v668 = vpack.c.b16 %v428, %v424
  %v669 = vpack.c.b16 %v429, %v425
  %v670 = vpack.c.b16 %v430, %v426
  %v671 = vpack.c.b16 %v435, %v431
  %v672 = vpack.c.b16 %v436, %v432
  %v673 = vpack.c.b16 %v437, %v433
  %v674 = vpack.c.b16 %v438, %v434
  %v675 = vpack.c.b16 %v443, %v439
  %v676 = vpack.c.b16 %v444, %v440
  %v677 = vpack.c.b16 %v445, %v441
  %v678 = vpack.c.b16 %v446, %v442
  %v679 = vpack.c.b16 %v451, %v447
  %v680 = vpack.c.b16 %v452, %v448
  %v681 = vpack.c.b16 %v453, %v449
  %v682 = vpack.c.b16 %v454, %v450
  %v683 = vpack.c.b16 %v459, %v455
  %v684 = vpack.c.b16 %v460, %v456
  %v685 = vpack.c.b16 %v461, %v457
  %v686 = vpack.c.b16 %v462, %v458
  %v687 = vpack.c.b16 %v467, %v463
  %v688 = vpack.c.b16 %v468, %v464
  %v689 = vpack.c.b16 %v469, %v465
  %v690 = vpack.c.b16 %v470, %v466
  %v691 = vpack.c.b16 %v475, %v471
  %v692 = vpack.c.b16 %v476, %v472
  %v693 = vpack.c.b16 %v477, %v473
  %v694 = vpack.c.b16 %v478, %v474
  %v695 = vpack.c.b16 %v483, %v479
  %v696 = vpack.c.b16 %v484, %v480
  %v697 = vpack.c.b16 %v485, %v481
  %v698 = vpack.c.b16 %v486, %v482
  %v699 = vpack.c.b16 %v491, %v487
  %v700 = vpack.c.b16 %v492, %v488
  %v701 = vpack.c.b16 %v493, %v489
  %v702 = vpack.c.b16 %v494, %v490
  %v703 = vpack.c.b16 %v499, %v495
  %v704 = vpack.c.b16 %v500, %v496
  %v705 = vpack.c.b16 %v501, %v497
  %v706 = vpack.c.b16 %v502, %v498
  %v707 = vpack.c.b16 %v507, %v503
  %v708 = vpack.c.b16 %v508, %v504
  %v709 = vpack.c.b16 %v509, %v505
  %v710 = vpack.c.b16 %v510, %v506
  %v711 = vpack.c.b16 %v515, %v511
  %v712 = vpack.c.b16 %v516, %v512
  %v713 = vpack.c.b16 %v517, %v513
  %v714 = vpack.c.b16 %v518, %v514
  %v715 = vpack.c.b16 %v523, %v519
  %v716 = vpack.c.b16 %v524, %v520
  %v717 = vpack.c.b16 %v525, %v521
  %v718 = vpack.c.b16 %v526, %v522
  %v719 = vpack.c.b16 %v531, %v527
  %v720 = vpack.c.b16 %v532, %v528
  %v721 = vpack.c.b16 %v533, %v529
  %v722 = vpack.c.b16 %v534, %v530
  %v723 = vpack.c.b16 %v539, %v535
  %v724 = vpack.c.b16 %v540, %v536
  %v725 = vpack.c.b16 %v541, %v537
  %v726 = vpack.c.b16 %v542, %v538
  %v727 = vpack.c.b16 %v547, %v543
  %v728 = vpack.c.b16 %v548, %v544
  %v729 = vpack.c.b16 %v549, %v545
  %v730 = vpack.c.b16 %v550, %v546
  %v731 = vpack.c.b16 %v555, %v551
  %v732 = vpack.c.b16 %v556, %v552
  %v733 = vpack.c.b16 %v557, %v553
  %v734 = vpack.c.b16 %v558, %v554
  %v735 = vpack.c.b16 %v563, %v559
  %v736 = vpack.c.b16 %v564, %v560
  %v737 = vpack.c.b16 %v565, %v561
  %v738 = vpack.c.b16 %v566, %v562
  %v739 = vpack.c.b16 %v571, %v567
  %v740 = vpack.c.b16 %v572, %v568
  %v741 = vpack.c.b16 %v573, %v569
  %v742 = vpack.c.b16 %v574, %v570
  %v743 = vpack.c.b16 %v579, %v575
  %v744 = vpack.c.b16 %v580, %v576
  %v745 = vpack.c.b16 %v581, %v577
  %v746 = vpack.c.b16 %v582, %v578
  %v747 = vpack.c.b16 %v587, %v583
  %v748 = vpack.c.b16 %v588, %v584
  %v749 = vpack.c.b16 %v589, %v585
  %v750 = vpack.c.b16 %v590, %v586
  %v751 = vpack.c.b16 %v595, %v591
  %v752 = vpack.c.b16 %v596, %v592
  %v753 = vpack.c.b16 %v597, %v593
  %v754 = vpack.c.b16 %v598, %v594
  %v755 = vpack.c.b16 %v603, %v599
  %v756 = vpack.c.b16 %v604, %v600
  %v757 = vpack.c.b16 %v605, %v601
  %v758 = vpack.c.b16 %v606, %v602
  %v759 = vpack.c.b16 %v611, %v607
  %v760 = vpack.c.b16 %v612, %v608
  %v761 = vpack.c.b16 %v613, %v609
  %v762 = vpack.c.b16 %v614, %v610
  %v763 = vpack.c.b16 %v619, %v615
  %v764 = vpack.c.b16 %v620, %v616
  %v765 = vpack.c.b16 %v621, %v617
  %v766 = vpack.c.b16 %v622, %v618
  %v767 = vpack.c.b16 %v627, %v623
  %v768 = vpack.c.b16 %v628, %v624
  %v769 = vpack.c.b16 %v629, %v625
  %v770 = vpack.c.b16 %v630, %v626
  %v771 = vpack.c.b16 %v635, %v631
  %v772 = vpack.c.b16 %v636, %v632
  %v773 = vpack.c.b16 %v637, %v633
  %v774 = vpack.c.b16 %v638, %v634
  %v775 = vpack.c.b16 %v643, %v639
  %v776 = vpack.c.b16 %v644, %v640
  %v777 = vpack.c.b16 %v645, %v641
  %v778 = vpack.c.b16 %v646, %v642
  %v779 = vpack.c.b16 %v651, %v647
  %v780 = vpack.c.b16 %v652, %v648
  %v781 = vpack.c.b16 %v653, %v649
  %v782 = vpack.c.b16 %v654, %v650
  %911 = vmatpush.bf16.msra.mxu0 %v683
  %912 = vmatpush.bf16.msra.mxu0 %v679
  %913 = vmatpush.bf16.msra.mxu0 %v675
  %914 = vmatpush.bf16.msra.mxu0 %v671
  %915 = vmatpush.bf16.msra.mxu0 %v667
  %916 = vmatpush.bf16.msra.mxu0 %v663
  %917 = vmatpush.bf16.msra.mxu0 %v659
  %918 = vmatpush.bf16.msra.mxu0 %v655
  %919 = vmatmul.bf16.gmra.mxu0 %v129
  %v920 = vpop.f32.mrf.mxu0
  %v921 = vadd.f32 %v263, %v920
  %v922 = vpop.f32.mrf.mxu0
  %923 = vdwg.mxu0
  %924 = vmatpush.bf16.msra.mxu0 %v715
  %925 = vmatpush.bf16.msra.mxu0 %v711
  %926 = vmatpush.bf16.msra.mxu0 %v707
  %927 = vmatpush.bf16.msra.mxu0 %v703
  %928 = vmatpush.bf16.msra.mxu0 %v699
  %929 = vmatpush.bf16.msra.mxu0 %v695
  %930 = vmatpush.bf16.msra.mxu0 %v691
  %931 = vmatpush.bf16.msra.mxu0 %v687
  %932 = vmatmul.bf16.gmra.mxu0 %v130
  %v933 = vpop.f32.mrf.mxu0
  %v934 = vadd.f32 %v921, %v933
  %v935 = vpop.f32.mrf.mxu0
  %936 = vdwg.mxu0
  %937 = vmatpush.bf16.msra.mxu0 %v747
  %938 = vmatpush.bf16.msra.mxu0 %v743
  %939 = vmatpush.bf16.msra.mxu0 %v739
  %940 = vmatpush.bf16.msra.mxu0 %v735
  %941 = vmatpush.bf16.msra.mxu0 %v731
  %942 = vmatpush.bf16.msra.mxu0 %v727
  %943 = vmatpush.bf16.msra.mxu0 %v723
  %944 = vmatpush.bf16.msra.mxu0 %v719
  %945 = vmatmul.bf16.gmra.mxu0 %v131
  %v946 = vpop.f32.mrf.mxu0
  %v947 = vadd.f32 %v934, %v946
  %v948 = vpop.f32.mrf.mxu0
  %949 = vdwg.mxu0
  %950 = vmatpush.bf16.msra.mxu0 %v779
  %951 = vmatpush.bf16.msra.mxu0 %v775
  %952 = vmatpush.bf16.msra.mxu0 %v771
  %953 = vmatpush.bf16.msra.mxu0 %v767
  %954 = vmatpush.bf16.msra.mxu0 %v763
  %955 = vmatpush.bf16.msra.mxu0 %v759
  %956 = vmatpush.bf16.msra.mxu0 %v755
  %957 = vmatpush.bf16.msra.mxu0 %v751
  %958 = vmatmul.bf16.gmra.mxu0 %v132
  %v959 = vpop.f32.mrf.mxu0
  %v960 = vadd.f32 %v947, %v959
  %v961 = vpop.f32.mrf.mxu0
  %962 = vdwg.mxu0
  %963 = vmatpush.bf16.msra.mxu0 %v684
  %964 = vmatpush.bf16.msra.mxu0 %v680
  %965 = vmatpush.bf16.msra.mxu0 %v676
  %966 = vmatpush.bf16.msra.mxu0 %v672
  %967 = vmatpush.bf16.msra.mxu0 %v668
  %968 = vmatpush.bf16.msra.mxu0 %v664
  %969 = vmatpush.bf16.msra.mxu0 %v660
  %970 = vmatpush.bf16.msra.mxu0 %v656
  %971 = vmatmul.bf16.gmra.mxu0 %v129
  %v972 = vpop.f32.mrf.mxu0
  %v973 = vadd.f32 %v264, %v972
  %v974 = vpop.f32.mrf.mxu0
  %975 = vdwg.mxu0
  %976 = vmatpush.bf16.msra.mxu0 %v716
  %977 = vmatpush.bf16.msra.mxu0 %v712
  %978 = vmatpush.bf16.msra.mxu0 %v708
  %979 = vmatpush.bf16.msra.mxu0 %v704
  %980 = vmatpush.bf16.msra.mxu0 %v700
  %981 = vmatpush.bf16.msra.mxu0 %v696
  %982 = vmatpush.bf16.msra.mxu0 %v692
  %983 = vmatpush.bf16.msra.mxu0 %v688
  %984 = vmatmul.bf16.gmra.mxu0 %v130
  %v985 = vpop.f32.mrf.mxu0
  %v986 = vadd.f32 %v973, %v985
  %v987 = vpop.f32.mrf.mxu0
  %988 = vdwg.mxu0
  %989 = vmatpush.bf16.msra.mxu0 %v748
  %990 = vmatpush.bf16.msra.mxu0 %v744
  %991 = vmatpush.bf16.msra.mxu0 %v740
  %992 = vmatpush.bf16.msra.mxu0 %v736
  %993 = vmatpush.bf16.msra.mxu0 %v732
  %994 = vmatpush.bf16.msra.mxu0 %v728
  %995 = vmatpush.bf16.msra.mxu0 %v724
  %996 = vmatpush.bf16.msra.mxu0 %v720
  %997 = vmatmul.bf16.gmra.mxu0 %v131
  %v998 = vpop.f32.mrf.mxu0
  %v999 = vadd.f32 %v986, %v998
  %v1000 = vpop.f32.mrf.mxu0
  %1001 = vdwg.mxu0
  %1002 = vmatpush.bf16.msra.mxu0 %v780
  %1003 = vmatpush.bf16.msra.mxu0 %v776
  %1004 = vmatpush.bf16.msra.mxu0 %v772
  %1005 = vmatpush.bf16.msra.mxu0 %v768
  %1006 = vmatpush.bf16.msra.mxu0 %v764
  %1007 = vmatpush.bf16.msra.mxu0 %v760
  %1008 = vmatpush.bf16.msra.mxu0 %v756
  %1009 = vmatpush.bf16.msra.mxu0 %v752
  %1010 = vmatmul.bf16.gmra.mxu0 %v132
  %v1011 = vpop.f32.mrf.mxu0
  %v1012 = vadd.f32 %v999, %v1011
  %v1013 = vpop.f32.mrf.mxu0
  %1014 = vdwg.mxu0
  %1015 = vmatpush.bf16.msra.mxu0 %v685
  %1016 = vmatpush.bf16.msra.mxu0 %v681
  %1017 = vmatpush.bf16.msra.mxu0 %v677
  %1018 = vmatpush.bf16.msra.mxu0 %v673
  %1019 = vmatpush.bf16.msra.mxu0 %v669
  %1020 = vmatpush.bf16.msra.mxu0 %v665
  %1021 = vmatpush.bf16.msra.mxu0 %v661
  %1022 = vmatpush.bf16.msra.mxu0 %v657
  %1023 = vmatmul.bf16.gmra.mxu0 %v129
  %v1024 = vpop.f32.mrf.mxu0
  %v1025 = vadd.f32 %v265, %v1024
  %v1026 = vpop.f32.mrf.mxu0
  %1027 = vdwg.mxu0
  %1028 = vmatpush.bf16.msra.mxu0 %v717
  %1029 = vmatpush.bf16.msra.mxu0 %v713
  %1030 = vmatpush.bf16.msra.mxu0 %v709
  %1031 = vmatpush.bf16.msra.mxu0 %v705
  %1032 = vmatpush.bf16.msra.mxu0 %v701
  %1033 = vmatpush.bf16.msra.mxu0 %v697
  %1034 = vmatpush.bf16.msra.mxu0 %v693
  %1035 = vmatpush.bf16.msra.mxu0 %v689
  %1036 = vmatmul.bf16.gmra.mxu0 %v130
  %v1037 = vpop.f32.mrf.mxu0
  %v1038 = vadd.f32 %v1025, %v1037
  %v1039 = vpop.f32.mrf.mxu0
  %1040 = vdwg.mxu0
  %1041 = vmatpush.bf16.msra.mxu0 %v749
  %1042 = vmatpush.bf16.msra.mxu0 %v745
  %1043 = vmatpush.bf16.msra.mxu0 %v741
  %1044 = vmatpush.bf16.msra.mxu0 %v737
  %1045 = vmatpush.bf16.msra.mxu0 %v733
  %1046 = vmatpush.bf16.msra.mxu0 %v729
  %1047 = vmatpush.bf16.msra.mxu0 %v725
  %1048 = vmatpush.bf16.msra.mxu0 %v721
  %1049 = vmatmul.bf16.gmra.mxu0 %v131
  %v1050 = vpop.f32.mrf.mxu0
  %v1051 = vadd.f32 %v1038, %v1050
  %v1052 = vpop.f32.mrf.mxu0
  %1053 = vdwg.mxu0
  %1054 = vmatpush.bf16.msra.mxu0 %v781
  %1055 = vmatpush.bf16.msra.mxu0 %v777
  %1056 = vmatpush.bf16.msra.mxu0 %v773
  %1057 = vmatpush.bf16.msra.mxu0 %v769
  %1058 = vmatpush.bf16.msra.mxu0 %v765
  %1059 = vmatpush.bf16.msra.mxu0 %v761
  %1060 = vmatpush.bf16.msra.mxu0 %v757
  %1061 = vmatpush.bf16.msra.mxu0 %v753
  %1062 = vmatmul.bf16.gmra.mxu0 %v132
  %v1063 = vpop.f32.mrf.mxu0
  %v1064 = vadd.f32 %v1051, %v1063
  %v1065 = vpop.f32.mrf.mxu0
  %1066 = vdwg.mxu0
  %1067 = vmatpush.bf16.msra.mxu0 %v686
  %1068 = vmatpush.bf16.msra.mxu0 %v682
  %1069 = vmatpush.bf16.msra.mxu0 %v678
  %1070 = vmatpush.bf16.msra.mxu0 %v674
  %1071 = vmatpush.bf16.msra.mxu0 %v670
  %1072 = vmatpush.bf16.msra.mxu0 %v666
  %1073 = vmatpush.bf16.msra.mxu0 %v662
  %1074 = vmatpush.bf16.msra.mxu0 %v658
  %1075 = vmatmul.bf16.gmra.mxu0 %v129
  %v1076 = vpop.f32.mrf.mxu0
  %v1077 = vadd.f32 %v266, %v1076
  %v1078 = vpop.f32.mrf.mxu0
  %1079 = vdwg.mxu0
  %1080 = vmatpush.bf16.msra.mxu0 %v718
  %1081 = vmatpush.bf16.msra.mxu0 %v714
  %1082 = vmatpush.bf16.msra.mxu0 %v710
  %1083 = vmatpush.bf16.msra.mxu0 %v706
  %1084 = vmatpush.bf16.msra.mxu0 %v702
  %1085 = vmatpush.bf16.msra.mxu0 %v698
  %1086 = vmatpush.bf16.msra.mxu0 %v694
  %1087 = vmatpush.bf16.msra.mxu0 %v690
  %1088 = vmatmul.bf16.gmra.mxu0 %v130
  %v1089 = vpop.f32.mrf.mxu0
  %v1090 = vadd.f32 %v1077, %v1089
  %v1091 = vpop.f32.mrf.mxu0
  %1092 = vdwg.mxu0
  %1093 = vmatpush.bf16.msra.mxu0 %v750
  %1094 = vmatpush.bf16.msra.mxu0 %v746
  %1095 = vmatpush.bf16.msra.mxu0 %v742
  %1096 = vmatpush.bf16.msra.mxu0 %v738
  %1097 = vmatpush.bf16.msra.mxu0 %v734
  %1098 = vmatpush.bf16.msra.mxu0 %v730
  %1099 = vmatpush.bf16.msra.mxu0 %v726
  %1100 = vmatpush.bf16.msra.mxu0 %v722
  %1101 = vmatmul.bf16.gmra.mxu0 %v131
  %v1102 = vpop.f32.mrf.mxu0
  %v1103 = vadd.f32 %v1090, %v1102
  %v1104 = vpop.f32.mrf.mxu0
  %1105 = vdwg.mxu0
  %1106 = vmatpush.bf16.msra.mxu0 %v782
  %1107 = vmatpush.bf16.msra.mxu0 %v778
  %1108 = vmatpush.bf16.msra.mxu0 %v774
  %1109 = vmatpush.bf16.msra.mxu0 %v770
  %1110 = vmatpush.bf16.msra.mxu0 %v766
  %1111 = vmatpush.bf16.msra.mxu0 %v762
  %1112 = vmatpush.bf16.msra.mxu0 %v758
  %1113 = vmatpush.bf16.msra.mxu0 %v754
  %1114 = vmatmul.bf16.gmra.mxu0 %v132
  %v1115 = vpop.f32.mrf.mxu0
  %v1116 = vadd.f32 %v1103, %v1115
  %v1117 = vpop.f32.mrf.mxu0
  %1118 = vdwg.mxu0
  %v1119 = vmax.f32 %v960, 0.0
  %v1120 = vmax.f32 %v1012, 0.0
  %v1121 = vmax.f32 %v1064, 0.0
  %v1122 = vmax.f32 %v1116, 0.0
  %v1123 = vpack.c.bf16 %v1119, %v1119
  %v1124 = vpack.c.bf16 %v1120, %v1120
  %v1125 = vpack.c.bf16 %v1121, %v1121
  %v1126 = vpack.c.bf16 %v1122, %v1122
  %v1127 = vld [vmem:[%s5] sm:$0xff]
  %v1128 = vld [vmem:[%s5 + $0x8] sm:$0xff]
  %v1129 = vld [vmem:[%s5 + $0x10] sm:$0xff]
  %v1130 = vld [vmem:[%s5 + $0x18] sm:$0xff]
  %v1131 = vld [vmem:[%s5 + $0x20] sm:$0xff]
  %v1132 = vld [vmem:[%s5 + $0x28] sm:$0xff]
  %v1133 = vld [vmem:[%s5 + $0x30] sm:$0xff]
  %v1134 = vld [vmem:[%s5 + $0x38] sm:$0xff]
  %v1135 = vld [vmem:[%s5 + $0x40] sm:$0xff]
  %v1136 = vld [vmem:[%s5 + $0x48] sm:$0xff]
  %v1137 = vld [vmem:[%s5 + $0x50] sm:$0xff]
  %v1138 = vld [vmem:[%s5 + $0x58] sm:$0xff]
  %v1139 = vld [vmem:[%s5 + $0x60] sm:$0xff]
  %v1140 = vld [vmem:[%s5 + $0x68] sm:$0xff]
  %v1141 = vld [vmem:[%s5 + $0x70] sm:$0xff]
  %v1142 = vld [vmem:[%s5 + $0x78] sm:$0xff]
  %v1143 = vld [vmem:[%s5 + $0x80] sm:$0xff]
  %v1144 = vld [vmem:[%s5 + $0x88] sm:$0xff]
  %v1145 = vld [vmem:[%s5 + $0x90] sm:$0xff]
  %v1146 = vld [vmem:[%s5 + $0x98] sm:$0xff]
  %v1147 = vld [vmem:[%s5 + $0xa0] sm:$0xff]
  %v1148 = vld [vmem:[%s5 + $0xa8] sm:$0xff]
  %v1149 = vld [vmem:[%s5 + $0xb0] sm:$0xff]
  %v1150 = vld [vmem:[%s5 + $0xb8] sm:$0xff]
  %v1151 = vld [vmem:[%s5 + $0xc0] sm:$0xff]
  %v1152 = vld [vmem:[%s5 + $0xc8] sm:$0xff]
  %v1153 = vld [vmem:[%s5 + $0xd0] sm:$0xff]
  %v1154 = vld [vmem:[%s5 + $0xd8] sm:$0xff]
  %v1155 = vld [vmem:[%s5 + $0xe0] sm:$0xff]
  %v1156 = vld [vmem:[%s5 + $0xe8] sm:$0xff]
  %v1157 = vld [vmem:[%s5 + $0xf0] sm:$0xff]
  %v1158 = vld [vmem:[%s5 + $0xf8] sm:$0xff]
  %v1159 = vld [vmem:[%s5 + $0x100] sm:$0xff]
  %v1160 = vld [vmem:[%s5 + $0x108] sm:$0xff]
  %v1161 = vld [vmem:[%s5 + $0x110] sm:$0xff]
  %v1162 = vld [vmem:[%s5 + $0x118] sm:$0xff]
  %v1163 = vld [vmem:[%s5 + $0x120] sm:$0xff]
  %v1164 = vld [vmem:[%s5 + $0x128] sm:$0xff]
  %v1165 = vld [vmem:[%s5 + $0x130] sm:$0xff]
  %v1166 = vld [vmem:[%s5 + $0x138] sm:$0xff]
  %v1167 = vld [vmem:[%s5 + $0x140] sm:$0xff]
  %v1168 = vld [vmem:[%s5 + $0x148] sm:$0xff]
  %v1169 = vld [vmem:[%s5 + $0x150] sm:$0xff]
  %v1170 = vld [vmem:[%s5 + $0x158] sm:$0xff]
  %v1171 = vld [vmem:[%s5 + $0x160] sm:$0xff]
  %v1172 = vld [vmem:[%s5 + $0x168] sm:$0xff]
  %v1173 = vld [vmem:[%s5 + $0x170] sm:$0xff]
  %v1174 = vld [vmem:[%s5 + $0x178] sm:$0xff]
  %v1175 = vld [vmem:[%s5 + $0x180] sm:$0xff]
  %v1176 = vld [vmem:[%s5 + $0x188] sm:$0xff]
  %v1177 = vld [vmem:[%s5 + $0x190] sm:$0xff]
  %v1178 = vld [vmem:[%s5 + $0x198] sm:$0xff]
  %v1179 = vld [vmem:[%s5 + $0x1a0] sm:$0xff]
  %v1180 = vld [vmem:[%s5 + $0x1a8] sm:$0xff]
  %v1181 = vld [vmem:[%s5 + $0x1b0] sm:$0xff]
  %v1182 = vld [vmem:[%s5 + $0x1b8] sm:$0xff]
  %v1183 = vld [vmem:[%s5 + $0x1c0] sm:$0xff]
  %v1184 = vld [vmem:[%s5 + $0x1c8] sm:$0xff]
  %v1185 = vld [vmem:[%s5 + $0x1d0] sm:$0xff]
  %v1186 = vld [vmem:[%s5 + $0x1d8] sm:$0xff]
  %v1187 = vld [vmem:[%s5 + $0x1e0] sm:$0xff]
  %v1188 = vld [vmem:[%s5 + $0x1e8] sm:$0xff]
  %v1189 = vld [vmem:[%s5 + $0x1f0] sm:$0xff]
  %v1190 = vld [vmem:[%s5 + $0x1f8] sm:$0xff]
  %v1191 = vld [vmem:[%s5 + $0x200] sm:$0xff]
  %v1192 = vld [vmem:[%s5 + $0x208] sm:$0xff]
  %v1193 = vld [vmem:[%s5 + $0x210] sm:$0xff]
  %v1194 = vld [vmem:[%s5 + $0x218] sm:$0xff]
  %v1195 = vld [vmem:[%s5 + $0x220] sm:$0xff]
  %v1196 = vld [vmem:[%s5 + $0x228] sm:$0xff]
  %v1197 = vld [vmem:[%s5 + $0x230] sm:$0xff]
  %v1198 = vld [vmem:[%s5 + $0x238] sm:$0xff]
  %v1199 = vld [vmem:[%s5 + $0x240] sm:$0xff]
  %v1200 = vld [vmem:[%s5 + $0x248] sm:$0xff]
  %v1201 = vld [vmem:[%s5 + $0x250] sm:$0xff]
  %v1202 = vld [vmem:[%s5 + $0x258] sm:$0xff]
  %v1203 = vld [vmem:[%s5 + $0x260] sm:$0xff]
  %v1204 = vld [vmem:[%s5 + $0x268] sm:$0xff]
  %v1205 = vld [vmem:[%s5 + $0x270] sm:$0xff]
  %v1206 = vld [vmem:[%s5 + $0x278] sm:$0xff]
  %v1207 = vld [vmem:[%s5 + $0x280] sm:$0xff]
  %v1208 = vld [vmem:[%s5 + $0x288] sm:$0xff]
  %v1209 = vld [vmem:[%s5 + $0x290] sm:$0xff]
  %v1210 = vld [vmem:[%s5 + $0x298] sm:$0xff]
  %v1211 = vld [vmem:[%s5 + $0x2a0] sm:$0xff]
  %v1212 = vld [vmem:[%s5 + $0x2a8] sm:$0xff]
  %v1213 = vld [vmem:[%s5 + $0x2b0] sm:$0xff]
  %v1214 = vld [vmem:[%s5 + $0x2b8] sm:$0xff]
  %v1215 = vld [vmem:[%s5 + $0x2c0] sm:$0xff]
  %v1216 = vld [vmem:[%s5 + $0x2c8] sm:$0xff]
  %v1217 = vld [vmem:[%s5 + $0x2d0] sm:$0xff]
  %v1218 = vld [vmem:[%s5 + $0x2d8] sm:$0xff]
  %v1219 = vld [vmem:[%s5 + $0x2e0] sm:$0xff]
  %v1220 = vld [vmem:[%s5 + $0x2e8] sm:$0xff]
  %v1221 = vld [vmem:[%s5 + $0x2f0] sm:$0xff]
  %v1222 = vld [vmem:[%s5 + $0x2f8] sm:$0xff]
  %v1223 = vld [vmem:[%s5 + $0x300] sm:$0xff]
  %v1224 = vld [vmem:[%s5 + $0x308] sm:$0xff]
  %v1225 = vld [vmem:[%s5 + $0x310] sm:$0xff]
  %v1226 = vld [vmem:[%s5 + $0x318] sm:$0xff]
  %v1227 = vld [vmem:[%s5 + $0x320] sm:$0xff]
  %v1228 = vld [vmem:[%s5 + $0x328] sm:$0xff]
  %v1229 = vld [vmem:[%s5 + $0x330] sm:$0xff]
  %v1230 = vld [vmem:[%s5 + $0x338] sm:$0xff]
  %v1231 = vld [vmem:[%s5 + $0x340] sm:$0xff]
  %v1232 = vld [vmem:[%s5 + $0x348] sm:$0xff]
  %v1233 = vld [vmem:[%s5 + $0x350] sm:$0xff]
  %v1234 = vld [vmem:[%s5 + $0x358] sm:$0xff]
  %v1235 = vld [vmem:[%s5 + $0x360] sm:$0xff]
  %v1236 = vld [vmem:[%s5 + $0x368] sm:$0xff]
  %v1237 = vld [vmem:[%s5 + $0x370] sm:$0xff]
  %v1238 = vld [vmem:[%s5 + $0x378] sm:$0xff]
  %v1239 = vld [vmem:[%s5 + $0x380] sm:$0xff]
  %v1240 = vld [vmem:[%s5 + $0x388] sm:$0xff]
  %v1241 = vld [vmem:[%s5 + $0x390] sm:$0xff]
  %v1242 = vld [vmem:[%s5 + $0x398] sm:$0xff]
  %v1243 = vld [vmem:[%s5 + $0x3a0] sm:$0xff]
  %v1244 = vld [vmem:[%s5 + $0x3a8] sm:$0xff]
  %v1245 = vld [vmem:[%s5 + $0x3b0] sm:$0xff]
  %v1246 = vld [vmem:[%s5 + $0x3b8] sm:$0xff]
  %v1247 = vld [vmem:[%s5 + $0x3c0] sm:$0xff]
  %v1248 = vld [vmem:[%s5 + $0x3c8] sm:$0xff]
  %v1249 = vld [vmem:[%s5 + $0x3d0] sm:$0xff]
  %v1250 = vld [vmem:[%s5 + $0x3d8] sm:$0xff]
  %v1251 = vld [vmem:[%s5 + $0x3e0] sm:$0xff]
  %v1252 = vld [vmem:[%s5 + $0x3e8] sm:$0xff]
  %v1253 = vld [vmem:[%s5 + $0x3f0] sm:$0xff]
  %v1254 = vld [vmem:[%s5 + $0x3f8] sm:$0xff]
  %v1255 = vld [vmem:[%s6] sm:$0xf]
  %v1257 = vperm.slane %v1255, 0
  %v1258 = vperm.slane %v1255, 1
  %v1259 = vperm.slane %v1255, 2
  %v1260 = vperm.slane %v1255, 3
  %v1393 = vunpack.c.l.b16 %v1127
  %v1394 = vunpack.c.h.b16 %v1127
  %v1395 = vunpack.c.l.b16 %v1128
  %v1396 = vunpack.c.h.b16 %v1128
  %v1397 = vunpack.c.l.b16 %v1129
  %v1398 = vunpack.c.h.b16 %v1129
  %v1399 = vunpack.c.l.b16 %v1130
  %v1400 = vunpack.c.h.b16 %v1130
  %v1401 = vunpack.c.l.b16 %v1131
  %v1402 = vunpack.c.h.b16 %v1131
  %v1403 = vunpack.c.l.b16 %v1132
  %v1404 = vunpack.c.h.b16 %v1132
  %v1405 = vunpack.c.l.b16 %v1133
  %v1406 = vunpack.c.h.b16 %v1133
  %v1407 = vunpack.c.l.b16 %v1134
  %v1408 = vunpack.c.h.b16 %v1134
  %v1409 = vunpack.c.l.b16 %v1135
  %v1410 = vunpack.c.h.b16 %v1135
  %v1411 = vunpack.c.l.b16 %v1136
  %v1412 = vunpack.c.h.b16 %v1136
  %v1413 = vunpack.c.l.b16 %v1137
  %v1414 = vunpack.c.h.b16 %v1137
  %v1415 = vunpack.c.l.b16 %v1138
  %v1416 = vunpack.c.h.b16 %v1138
  %v1417 = vunpack.c.l.b16 %v1139
  %v1418 = vunpack.c.h.b16 %v1139
  %v1419 = vunpack.c.l.b16 %v1140
  %v1420 = vunpack.c.h.b16 %v1140
  %v1421 = vunpack.c.l.b16 %v1141
  %v1422 = vunpack.c.h.b16 %v1141
  %v1423 = vunpack.c.l.b16 %v1142
  %v1424 = vunpack.c.h.b16 %v1142
  %v1425 = vunpack.c.l.b16 %v1143
  %v1426 = vunpack.c.h.b16 %v1143
  %v1427 = vunpack.c.l.b16 %v1144
  %v1428 = vunpack.c.h.b16 %v1144
  %v1429 = vunpack.c.l.b16 %v1145
  %v1430 = vunpack.c.h.b16 %v1145
  %v1431 = vunpack.c.l.b16 %v1146
  %v1432 = vunpack.c.h.b16 %v1146
  %v1433 = vunpack.c.l.b16 %v1147
  %v1434 = vunpack.c.h.b16 %v1147
  %v1435 = vunpack.c.l.b16 %v1148
  %v1436 = vunpack.c.h.b16 %v1148
  %v1437 = vunpack.c.l.b16 %v1149
  %v1438 = vunpack.c.h.b16 %v1149
  %v1439 = vunpack.c.l.b16 %v1150
  %v1440 = vunpack.c.h.b16 %v1150
  %v1441 = vunpack.c.l.b16 %v1151
  %v1442 = vunpack.c.h.b16 %v1151
  %v1443 = vunpack.c.l.b16 %v1152
  %v1444 = vunpack.c.h.b16 %v1152
  %v1445 = vunpack.c.l.b16 %v1153
  %v1446 = vunpack.c.h.b16 %v1153
  %v1447 = vunpack.c.l.b16 %v1154
  %v1448 = vunpack.c.h.b16 %v1154
  %v1449 = vunpack.c.l.b16 %v1155
  %v1450 = vunpack.c.h.b16 %v1155
  %v1451 = vunpack.c.l.b16 %v1156
  %v1452 = vunpack.c.h.b16 %v1156
  %v1453 = vunpack.c.l.b16 %v1157
  %v1454 = vunpack.c.h.b16 %v1157
  %v1455 = vunpack.c.l.b16 %v1158
  %v1456 = vunpack.c.h.b16 %v1158
  %v1457 = vunpack.c.l.b16 %v1159
  %v1458 = vunpack.c.h.b16 %v1159
  %v1459 = vunpack.c.l.b16 %v1160
  %v1460 = vunpack.c.h.b16 %v1160
  %v1461 = vunpack.c.l.b16 %v1161
  %v1462 = vunpack.c.h.b16 %v1161
  %v1463 = vunpack.c.l.b16 %v1162
  %v1464 = vunpack.c.h.b16 %v1162
  %v1465 = vunpack.c.l.b16 %v1163
  %v1466 = vunpack.c.h.b16 %v1163
  %v1467 = vunpack.c.l.b16 %v1164
  %v1468 = vunpack.c.h.b16 %v1164
  %v1469 = vunpack.c.l.b16 %v1165
  %v1470 = vunpack.c.h.b16 %v1165
  %v1471 = vunpack.c.l.b16 %v1166
  %v1472 = vunpack.c.h.b16 %v1166
  %v1473 = vunpack.c.l.b16 %v1167
  %v1474 = vunpack.c.h.b16 %v1167
  %v1475 = vunpack.c.l.b16 %v1168
  %v1476 = vunpack.c.h.b16 %v1168
  %v1477 = vunpack.c.l.b16 %v1169
  %v1478 = vunpack.c.h.b16 %v1169
  %v1479 = vunpack.c.l.b16 %v1170
  %v1480 = vunpack.c.h.b16 %v1170
  %v1481 = vunpack.c.l.b16 %v1171
  %v1482 = vunpack.c.h.b16 %v1171
  %v1483 = vunpack.c.l.b16 %v1172
  %v1484 = vunpack.c.h.b16 %v1172
  %v1485 = vunpack.c.l.b16 %v1173
  %v1486 = vunpack.c.h.b16 %v1173
  %v1487 = vunpack.c.l.b16 %v1174
  %v1488 = vunpack.c.h.b16 %v1174
  %v1489 = vunpack.c.l.b16 %v1175
  %v1490 = vunpack.c.h.b16 %v1175
  %v1491 = vunpack.c.l.b16 %v1176
  %v1492 = vunpack.c.h.b16 %v1176
  %v1493 = vunpack.c.l.b16 %v1177
  %v1494 = vunpack.c.h.b16 %v1177
  %v1495 = vunpack.c.l.b16 %v1178
  %v1496 = vunpack.c.h.b16 %v1178
  %v1497 = vunpack.c.l.b16 %v1179
  %v1498 = vunpack.c.h.b16 %v1179
  %v1499 = vunpack.c.l.b16 %v1180
  %v1500 = vunpack.c.h.b16 %v1180
  %v1501 = vunpack.c.l.b16 %v1181
  %v1502 = vunpack.c.h.b16 %v1181
  %v1503 = vunpack.c.l.b16 %v1182
  %v1504 = vunpack.c.h.b16 %v1182
  %v1505 = vunpack.c.l.b16 %v1183
  %v1506 = vunpack.c.h.b16 %v1183
  %v1507 = vunpack.c.l.b16 %v1184
  %v1508 = vunpack.c.h.b16 %v1184
  %v1509 = vunpack.c.l.b16 %v1185
  %v1510 = vunpack.c.h.b16 %v1185
  %v1511 = vunpack.c.l.b16 %v1186
  %v1512 = vunpack.c.h.b16 %v1186
  %v1513 = vunpack.c.l.b16 %v1187
  %v1514 = vunpack.c.h.b16 %v1187
  %v1515 = vunpack.c.l.b16 %v1188
  %v1516 = vunpack.c.h.b16 %v1188
  %v1517 = vunpack.c.l.b16 %v1189
  %v1518 = vunpack.c.h.b16 %v1189
  %v1519 = vunpack.c.l.b16 %v1190
  %v1520 = vunpack.c.h.b16 %v1190
  %v1521 = vunpack.c.l.b16 %v1191
  %v1522 = vunpack.c.h.b16 %v1191
  %v1523 = vunpack.c.l.b16 %v1192
  %v1524 = vunpack.c.h.b16 %v1192
  %v1525 = vunpack.c.l.b16 %v1193
  %v1526 = vunpack.c.h.b16 %v1193
  %v1527 = vunpack.c.l.b16 %v1194
  %v1528 = vunpack.c.h.b16 %v1194
  %v1529 = vunpack.c.l.b16 %v1195
  %v1530 = vunpack.c.h.b16 %v1195
  %v1531 = vunpack.c.l.b16 %v1196
  %v1532 = vunpack.c.h.b16 %v1196
  %v1533 = vunpack.c.l.b16 %v1197
  %v1534 = vunpack.c.h.b16 %v1197
  %v1535 = vunpack.c.l.b16 %v1198
  %v1536 = vunpack.c.h.b16 %v1198
  %v1537 = vunpack.c.l.b16 %v1199
  %v1538 = vunpack.c.h.b16 %v1199
  %v1539 = vunpack.c.l.b16 %v1200
  %v1540 = vunpack.c.h.b16 %v1200
  %v1541 = vunpack.c.l.b16 %v1201
  %v1542 = vunpack.c.h.b16 %v1201
  %v1543 = vunpack.c.l.b16 %v1202
  %v1544 = vunpack.c.h.b16 %v1202
  %v1545 = vunpack.c.l.b16 %v1203
  %v1546 = vunpack.c.h.b16 %v1203
  %v1547 = vunpack.c.l.b16 %v1204
  %v1548 = vunpack.c.h.b16 %v1204
  %v1549 = vunpack.c.l.b16 %v1205
  %v1550 = vunpack.c.h.b16 %v1205
  %v1551 = vunpack.c.l.b16 %v1206
  %v1552 = vunpack.c.h.b16 %v1206
  %v1553 = vunpack.c.l.b16 %v1207
  %v1554 = vunpack.c.h.b16 %v1207
  %v1555 = vunpack.c.l.b16 %v1208
  %v1556 = vunpack.c.h.b16 %v1208
  %v1557 = vunpack.c.l.b16 %v1209
  %v1558 = vunpack.c.h.b16 %v1209
  %v1559 = vunpack.c.l.b16 %v1210
  %v1560 = vunpack.c.h.b16 %v1210
  %v1561 = vunpack.c.l.b16 %v1211
  %v1562 = vunpack.c.h.b16 %v1211
  %v1563 = vunpack.c.l.b16 %v1212
  %v1564 = vunpack.c.h.b16 %v1212
  %v1565 = vunpack.c.l.b16 %v1213
  %v1566 = vunpack.c.h.b16 %v1213
  %v1567 = vunpack.c.l.b16 %v1214
  %v1568 = vunpack.c.h.b16 %v1214
  %v1569 = vunpack.c.l.b16 %v1215
  %v1570 = vunpack.c.h.b16 %v1215
  %v1571 = vunpack.c.l.b16 %v1216
  %v1572 = vunpack.c.h.b16 %v1216
  %v1573 = vunpack.c.l.b16 %v1217
  %v1574 = vunpack.c.h.b16 %v1217
  %v1575 = vunpack.c.l.b16 %v1218
  %v1576 = vunpack.c.h.b16 %v1218
  %v1577 = vunpack.c.l.b16 %v1219
  %v1578 = vunpack.c.h.b16 %v1219
  %v1579 = vunpack.c.l.b16 %v1220
  %v1580 = vunpack.c.h.b16 %v1220
  %v1581 = vunpack.c.l.b16 %v1221
  %v1582 = vunpack.c.h.b16 %v1221
  %v1583 = vunpack.c.l.b16 %v1222
  %v1584 = vunpack.c.h.b16 %v1222
  %v1585 = vunpack.c.l.b16 %v1223
  %v1586 = vunpack.c.h.b16 %v1223
  %v1587 = vunpack.c.l.b16 %v1224
  %v1588 = vunpack.c.h.b16 %v1224
  %v1589 = vunpack.c.l.b16 %v1225
  %v1590 = vunpack.c.h.b16 %v1225
  %v1591 = vunpack.c.l.b16 %v1226
  %v1592 = vunpack.c.h.b16 %v1226
  %v1593 = vunpack.c.l.b16 %v1227
  %v1594 = vunpack.c.h.b16 %v1227
  %v1595 = vunpack.c.l.b16 %v1228
  %v1596 = vunpack.c.h.b16 %v1228
  %v1597 = vunpack.c.l.b16 %v1229
  %v1598 = vunpack.c.h.b16 %v1229
  %v1599 = vunpack.c.l.b16 %v1230
  %v1600 = vunpack.c.h.b16 %v1230
  %v1601 = vunpack.c.l.b16 %v1231
  %v1602 = vunpack.c.h.b16 %v1231
  %v1603 = vunpack.c.l.b16 %v1232
  %v1604 = vunpack.c.h.b16 %v1232
  %v1605 = vunpack.c.l.b16 %v1233
  %v1606 = vunpack.c.h.b16 %v1233
  %v1607 = vunpack.c.l.b16 %v1234
  %v1608 = vunpack.c.h.b16 %v1234
  %v1609 = vunpack.c.l.b16 %v1235
  %v1610 = vunpack.c.h.b16 %v1235
  %v1611 = vunpack.c.l.b16 %v1236
  %v1612 = vunpack.c.h.b16 %v1236
  %v1613 = vunpack.c.l.b16 %v1237
  %v1614 = vunpack.c.h.b16 %v1237
  %v1615 = vunpack.c.l.b16 %v1238
  %v1616 = vunpack.c.h.b16 %v1238
  %v1617 = vunpack.c.l.b16 %v1239
  %v1618 = vunpack.c.h.b16 %v1239
  %v1619 = vunpack.c.l.b16 %v1240
  %v1620 = vunpack.c.h.b16 %v1240
  %v1621 = vunpack.c.l.b16 %v1241
  %v1622 = vunpack.c.h.b16 %v1241
  %v1623 = vunpack.c.l.b16 %v1242
  %v1624 = vunpack.c.h.b16 %v1242
  %v1625 = vunpack.c.l.b16 %v1243
  %v1626 = vunpack.c.h.b16 %v1243
  %v1627 = vunpack.c.l.b16 %v1244
  %v1628 = vunpack.c.h.b16 %v1244
  %v1629 = vunpack.c.l.b16 %v1245
  %v1630 = vunpack.c.h.b16 %v1245
  %v1631 = vunpack.c.l.b16 %v1246
  %v1632 = vunpack.c.h.b16 %v1246
  %v1633 = vunpack.c.l.b16 %v1247
  %v1634 = vunpack.c.h.b16 %v1247
  %v1635 = vunpack.c.l.b16 %v1248
  %v1636 = vunpack.c.h.b16 %v1248
  %v1637 = vunpack.c.l.b16 %v1249
  %v1638 = vunpack.c.h.b16 %v1249
  %v1639 = vunpack.c.l.b16 %v1250
  %v1640 = vunpack.c.h.b16 %v1250
  %v1641 = vunpack.c.l.b16 %v1251
  %v1642 = vunpack.c.h.b16 %v1251
  %v1643 = vunpack.c.l.b16 %v1252
  %v1644 = vunpack.c.h.b16 %v1252
  %v1645 = vunpack.c.l.b16 %v1253
  %v1646 = vunpack.c.h.b16 %v1253
  %v1647 = vunpack.c.l.b16 %v1254
  %v1648 = vunpack.c.h.b16 %v1254
  %v1649 = vpack.c.b16 %v1397, %v1393
  %v1650 = vpack.c.b16 %v1398, %v1394
  %v1651 = vpack.c.b16 %v1399, %v1395
  %v1652 = vpack.c.b16 %v1400, %v1396
  %v1653 = vpack.c.b16 %v1405, %v1401
  %v1654 = vpack.c.b16 %v1406, %v1402
  %v1655 = vpack.c.b16 %v1407, %v1403
  %v1656 = vpack.c.b16 %v1408, %v1404
  %v1657 = vpack.c.b16 %v1413, %v1409
  %v1658 = vpack.c.b16 %v1414, %v1410
  %v1659 = vpack.c.b16 %v1415, %v1411
  %v1660 = vpack.c.b16 %v1416, %v1412
  %v1661 = vpack.c.b16 %v1421, %v1417
  %v1662 = vpack.c.b16 %v1422, %v1418
  %v1663 = vpack.c.b16 %v1423, %v1419
  %v1664 = vpack.c.b16 %v1424, %v1420
  %v1665 = vpack.c.b16 %v1429, %v1425
  %v1666 = vpack.c.b16 %v1430, %v1426
  %v1667 = vpack.c.b16 %v1431, %v1427
  %v1668 = vpack.c.b16 %v1432, %v1428
  %v1669 = vpack.c.b16 %v1437, %v1433
  %v1670 = vpack.c.b16 %v1438, %v1434
  %v1671 = vpack.c.b16 %v1439, %v1435
  %v1672 = vpack.c.b16 %v1440, %v1436
  %v1673 = vpack.c.b16 %v1445, %v1441
  %v1674 = vpack.c.b16 %v1446, %v1442
  %v1675 = vpack.c.b16 %v1447, %v1443
  %v1676 = vpack.c.b16 %v1448, %v1444
  %v1677 = vpack.c.b16 %v1453, %v1449
  %v1678 = vpack.c.b16 %v1454, %v1450
  %v1679 = vpack.c.b16 %v1455, %v1451
  %v1680 = vpack.c.b16 %v1456, %v1452
  %v1681 = vpack.c.b16 %v1461, %v1457
  %v1682 = vpack.c.b16 %v1462, %v1458
  %v1683 = vpack.c.b16 %v1463, %v1459
  %v1684 = vpack.c.b16 %v1464, %v1460
  %v1685 = vpack.c.b16 %v1469, %v1465
  %v1686 = vpack.c.b16 %v1470, %v1466
  %v1687 = vpack.c.b16 %v1471, %v1467
  %v1688 = vpack.c.b16 %v1472, %v1468
  %v1689 = vpack.c.b16 %v1477, %v1473
  %v1690 = vpack.c.b16 %v1478, %v1474
  %v1691 = vpack.c.b16 %v1479, %v1475
  %v1692 = vpack.c.b16 %v1480, %v1476
  %v1693 = vpack.c.b16 %v1485, %v1481
  %v1694 = vpack.c.b16 %v1486, %v1482
  %v1695 = vpack.c.b16 %v1487, %v1483
  %v1696 = vpack.c.b16 %v1488, %v1484
  %v1697 = vpack.c.b16 %v1493, %v1489
  %v1698 = vpack.c.b16 %v1494, %v1490
  %v1699 = vpack.c.b16 %v1495, %v1491
  %v1700 = vpack.c.b16 %v1496, %v1492
  %v1701 = vpack.c.b16 %v1501, %v1497
  %v1702 = vpack.c.b16 %v1502, %v1498
  %v1703 = vpack.c.b16 %v1503, %v1499
  %v1704 = vpack.c.b16 %v1504, %v1500
  %v1705 = vpack.c.b16 %v1509, %v1505
  %v1706 = vpack.c.b16 %v1510, %v1506
  %v1707 = vpack.c.b16 %v1511, %v1507
  %v1708 = vpack.c.b16 %v1512, %v1508
  %v1709 = vpack.c.b16 %v1517, %v1513
  %v1710 = vpack.c.b16 %v1518, %v1514
  %v1711 = vpack.c.b16 %v1519, %v1515
  %v1712 = vpack.c.b16 %v1520, %v1516
  %v1713 = vpack.c.b16 %v1525, %v1521
  %v1714 = vpack.c.b16 %v1526, %v1522
  %v1715 = vpack.c.b16 %v1527, %v1523
  %v1716 = vpack.c.b16 %v1528, %v1524
  %v1717 = vpack.c.b16 %v1533, %v1529
  %v1718 = vpack.c.b16 %v1534, %v1530
  %v1719 = vpack.c.b16 %v1535, %v1531
  %v1720 = vpack.c.b16 %v1536, %v1532
  %v1721 = vpack.c.b16 %v1541, %v1537
  %v1722 = vpack.c.b16 %v1542, %v1538
  %v1723 = vpack.c.b16 %v1543, %v1539
  %v1724 = vpack.c.b16 %v1544, %v1540
  %v1725 = vpack.c.b16 %v1549, %v1545
  %v1726 = vpack.c.b16 %v1550, %v1546
  %v1727 = vpack.c.b16 %v1551, %v1547
  %v1728 = vpack.c.b16 %v1552, %v1548
  %v1729 = vpack.c.b16 %v1557, %v1553
  %v1730 = vpack.c.b16 %v1558, %v1554
  %v1731 = vpack.c.b16 %v1559, %v1555
  %v1732 = vpack.c.b16 %v1560, %v1556
  %v1733 = vpack.c.b16 %v1565, %v1561
  %v1734 = vpack.c.b16 %v1566, %v1562
  %v1735 = vpack.c.b16 %v1567, %v1563
  %v1736 = vpack.c.b16 %v1568, %v1564
  %v1737 = vpack.c.b16 %v1573, %v1569
  %v1738 = vpack.c.b16 %v1574, %v1570
  %v1739 = vpack.c.b16 %v1575, %v1571
  %v1740 = vpack.c.b16 %v1576, %v1572
  %v1741 = vpack.c.b16 %v1581, %v1577
  %v1742 = vpack.c.b16 %v1582, %v1578
  %v1743 = vpack.c.b16 %v1583, %v1579
  %v1744 = vpack.c.b16 %v1584, %v1580
  %v1745 = vpack.c.b16 %v1589, %v1585
  %v1746 = vpack.c.b16 %v1590, %v1586
  %v1747 = vpack.c.b16 %v1591, %v1587
  %v1748 = vpack.c.b16 %v1592, %v1588
  %v1749 = vpack.c.b16 %v1597, %v1593
  %v1750 = vpack.c.b16 %v1598, %v1594
  %v1751 = vpack.c.b16 %v1599, %v1595
  %v1752 = vpack.c.b16 %v1600, %v1596
  %v1753 = vpack.c.b16 %v1605, %v1601
  %v1754 = vpack.c.b16 %v1606, %v1602
  %v1755 = vpack.c.b16 %v1607, %v1603
  %v1756 = vpack.c.b16 %v1608, %v1604
  %v1757 = vpack.c.b16 %v1613, %v1609
  %v1758 = vpack.c.b16 %v1614, %v1610
  %v1759 = vpack.c.b16 %v1615, %v1611
  %v1760 = vpack.c.b16 %v1616, %v1612
  %v1761 = vpack.c.b16 %v1621, %v1617
  %v1762 = vpack.c.b16 %v1622, %v1618
  %v1763 = vpack.c.b16 %v1623, %v1619
  %v1764 = vpack.c.b16 %v1624, %v1620
  %v1765 = vpack.c.b16 %v1629, %v1625
  %v1766 = vpack.c.b16 %v1630, %v1626
  %v1767 = vpack.c.b16 %v1631, %v1627
  %v1768 = vpack.c.b16 %v1632, %v1628
  %v1769 = vpack.c.b16 %v1637, %v1633
  %v1770 = vpack.c.b16 %v1638, %v1634
  %v1771 = vpack.c.b16 %v1639, %v1635
  %v1772 = vpack.c.b16 %v1640, %v1636
  %v1773 = vpack.c.b16 %v1645, %v1641
  %v1774 = vpack.c.b16 %v1646, %v1642
  %v1775 = vpack.c.b16 %v1647, %v1643
  %v1776 = vpack.c.b16 %v1648, %v1644
  %1905 = vmatpush.bf16.msra.mxu0 %v1677
  %1906 = vmatpush.bf16.msra.mxu0 %v1673
  %1907 = vmatpush.bf16.msra.mxu0 %v1669
  %1908 = vmatpush.bf16.msra.mxu0 %v1665
  %1909 = vmatpush.bf16.msra.mxu0 %v1661
  %1910 = vmatpush.bf16.msra.mxu0 %v1657
  %1911 = vmatpush.bf16.msra.mxu0 %v1653
  %1912 = vmatpush.bf16.msra.mxu0 %v1649
  %1913 = vmatmul.bf16.gmra.mxu0 %v1123
  %v1914 = vpop.f32.mrf.mxu0
  %v1915 = vadd.f32 %v1257, %v1914
  %v1916 = vpop.f32.mrf.mxu0
  %1917 = vdwg.mxu0
  %1918 = vmatpush.bf16.msra.mxu0 %v1709
  %1919 = vmatpush.bf16.msra.mxu0 %v1705
  %1920 = vmatpush.bf16.msra.mxu0 %v1701
  %1921 = vmatpush.bf16.msra.mxu0 %v1697
  %1922 = vmatpush.bf16.msra.mxu0 %v1693
  %1923 = vmatpush.bf16.msra.mxu0 %v1689
  %1924 = vmatpush.bf16.msra.mxu0 %v1685
  %1925 = vmatpush.bf16.msra.mxu0 %v1681
  %1926 = vmatmul.bf16.gmra.mxu0 %v1124
  %v1927 = vpop.f32.mrf.mxu0
  %v1928 = vadd.f32 %v1915, %v1927
  %v1929 = vpop.f32.mrf.mxu0
  %1930 = vdwg.mxu0
  %1931 = vmatpush.bf16.msra.mxu0 %v1741
  %1932 = vmatpush.bf16.msra.mxu0 %v1737
  %1933 = vmatpush.bf16.msra.mxu0 %v1733
  %1934 = vmatpush.bf16.msra.mxu0 %v1729
  %1935 = vmatpush.bf16.msra.mxu0 %v1725
  %1936 = vmatpush.bf16.msra.mxu0 %v1721
  %1937 = vmatpush.bf16.msra.mxu0 %v1717
  %1938 = vmatpush.bf16.msra.mxu0 %v1713
  %1939 = vmatmul.bf16.gmra.mxu0 %v1125
  %v1940 = vpop.f32.mrf.mxu0
  %v1941 = vadd.f32 %v1928, %v1940
  %v1942 = vpop.f32.mrf.mxu0
  %1943 = vdwg.mxu0
  %1944 = vmatpush.bf16.msra.mxu0 %v1773
  %1945 = vmatpush.bf16.msra.mxu0 %v1769
  %1946 = vmatpush.bf16.msra.mxu0 %v1765
  %1947 = vmatpush.bf16.msra.mxu0 %v1761
  %1948 = vmatpush.bf16.msra.mxu0 %v1757
  %1949 = vmatpush.bf16.msra.mxu0 %v1753
  %1950 = vmatpush.bf16.msra.mxu0 %v1749
  %1951 = vmatpush.bf16.msra.mxu0 %v1745
  %1952 = vmatmul.bf16.gmra.mxu0 %v1126
  %v1953 = vpop.f32.mrf.mxu0
  %v1954 = vadd.f32 %v1941, %v1953
  %v1955 = vpop.f32.mrf.mxu0
  %1956 = vdwg.mxu0
  %1957 = vmatpush.bf16.msra.mxu0 %v1678
  %1958 = vmatpush.bf16.msra.mxu0 %v1674
  %1959 = vmatpush.bf16.msra.mxu0 %v1670
  %1960 = vmatpush.bf16.msra.mxu0 %v1666
  %1961 = vmatpush.bf16.msra.mxu0 %v1662
  %1962 = vmatpush.bf16.msra.mxu0 %v1658
  %1963 = vmatpush.bf16.msra.mxu0 %v1654
  %1964 = vmatpush.bf16.msra.mxu0 %v1650
  %1965 = vmatmul.bf16.gmra.mxu0 %v1123
  %v1966 = vpop.f32.mrf.mxu0
  %v1967 = vadd.f32 %v1258, %v1966
  %v1968 = vpop.f32.mrf.mxu0
  %1969 = vdwg.mxu0
  %1970 = vmatpush.bf16.msra.mxu0 %v1710
  %1971 = vmatpush.bf16.msra.mxu0 %v1706
  %1972 = vmatpush.bf16.msra.mxu0 %v1702
  %1973 = vmatpush.bf16.msra.mxu0 %v1698
  %1974 = vmatpush.bf16.msra.mxu0 %v1694
  %1975 = vmatpush.bf16.msra.mxu0 %v1690
  %1976 = vmatpush.bf16.msra.mxu0 %v1686
  %1977 = vmatpush.bf16.msra.mxu0 %v1682
  %1978 = vmatmul.bf16.gmra.mxu0 %v1124
  %v1979 = vpop.f32.mrf.mxu0
  %v1980 = vadd.f32 %v1967, %v1979
  %v1981 = vpop.f32.mrf.mxu0
  %1982 = vdwg.mxu0
  %1983 = vmatpush.bf16.msra.mxu0 %v1742
  %1984 = vmatpush.bf16.msra.mxu0 %v1738
  %1985 = vmatpush.bf16.msra.mxu0 %v1734
  %1986 = vmatpush.bf16.msra.mxu0 %v1730
  %1987 = vmatpush.bf16.msra.mxu0 %v1726
  %1988 = vmatpush.bf16.msra.mxu0 %v1722
  %1989 = vmatpush.bf16.msra.mxu0 %v1718
  %1990 = vmatpush.bf16.msra.mxu0 %v1714
  %1991 = vmatmul.bf16.gmra.mxu0 %v1125
  %v1992 = vpop.f32.mrf.mxu0
  %v1993 = vadd.f32 %v1980, %v1992
  %v1994 = vpop.f32.mrf.mxu0
  %1995 = vdwg.mxu0
  %1996 = vmatpush.bf16.msra.mxu0 %v1774
  %1997 = vmatpush.bf16.msra.mxu0 %v1770
  %1998 = vmatpush.bf16.msra.mxu0 %v1766
  %1999 = vmatpush.bf16.msra.mxu0 %v1762
  %2000 = vmatpush.bf16.msra.mxu0 %v1758
  %2001 = vmatpush.bf16.msra.mxu0 %v1754
  %2002 = vmatpush.bf16.msra.mxu0 %v1750
  %2003 = vmatpush.bf16.msra.mxu0 %v1746
  %2004 = vmatmul.bf16.gmra.mxu0 %v1126
  %v2005 = vpop.f32.mrf.mxu0
  %v2006 = vadd.f32 %v1993, %v2005
  %v2007 = vpop.f32.mrf.mxu0
  %2008 = vdwg.mxu0
  %2009 = vmatpush.bf16.msra.mxu0 %v1679
  %2010 = vmatpush.bf16.msra.mxu0 %v1675
  %2011 = vmatpush.bf16.msra.mxu0 %v1671
  %2012 = vmatpush.bf16.msra.mxu0 %v1667
  %2013 = vmatpush.bf16.msra.mxu0 %v1663
  %2014 = vmatpush.bf16.msra.mxu0 %v1659
  %2015 = vmatpush.bf16.msra.mxu0 %v1655
  %2016 = vmatpush.bf16.msra.mxu0 %v1651
  %2017 = vmatmul.bf16.gmra.mxu0 %v1123
  %v2018 = vpop.f32.mrf.mxu0
  %v2019 = vadd.f32 %v1259, %v2018
  %v2020 = vpop.f32.mrf.mxu0
  %2021 = vdwg.mxu0
  %2022 = vmatpush.bf16.msra.mxu0 %v1711
  %2023 = vmatpush.bf16.msra.mxu0 %v1707
  %2024 = vmatpush.bf16.msra.mxu0 %v1703
  %2025 = vmatpush.bf16.msra.mxu0 %v1699
  %2026 = vmatpush.bf16.msra.mxu0 %v1695
  %2027 = vmatpush.bf16.msra.mxu0 %v1691
  %2028 = vmatpush.bf16.msra.mxu0 %v1687
  %2029 = vmatpush.bf16.msra.mxu0 %v1683
  %2030 = vmatmul.bf16.gmra.mxu0 %v1124
  %v2031 = vpop.f32.mrf.mxu0
  %v2032 = vadd.f32 %v2019, %v2031
  %v2033 = vpop.f32.mrf.mxu0
  %2034 = vdwg.mxu0
  %2035 = vmatpush.bf16.msra.mxu0 %v1743
  %2036 = vmatpush.bf16.msra.mxu0 %v1739
  %2037 = vmatpush.bf16.msra.mxu0 %v1735
  %2038 = vmatpush.bf16.msra.mxu0 %v1731
  %2039 = vmatpush.bf16.msra.mxu0 %v1727
  %2040 = vmatpush.bf16.msra.mxu0 %v1723
  %2041 = vmatpush.bf16.msra.mxu0 %v1719
  %2042 = vmatpush.bf16.msra.mxu0 %v1715
  %2043 = vmatmul.bf16.gmra.mxu0 %v1125
  %v2044 = vpop.f32.mrf.mxu0
  %v2045 = vadd.f32 %v2032, %v2044
  %v2046 = vpop.f32.mrf.mxu0
  %2047 = vdwg.mxu0
  %2048 = vmatpush.bf16.msra.mxu0 %v1775
  %2049 = vmatpush.bf16.msra.mxu0 %v1771
  %2050 = vmatpush.bf16.msra.mxu0 %v1767
  %2051 = vmatpush.bf16.msra.mxu0 %v1763
  %2052 = vmatpush.bf16.msra.mxu0 %v1759
  %2053 = vmatpush.bf16.msra.mxu0 %v1755
  %2054 = vmatpush.bf16.msra.mxu0 %v1751
  %2055 = vmatpush.bf16.msra.mxu0 %v1747
  %2056 = vmatmul.bf16.gmra.mxu0 %v1126
  %v2057 = vpop.f32.mrf.mxu0
  %v2058 = vadd.f32 %v2045, %v2057
  %v2059 = vpop.f32.mrf.mxu0
  %2060 = vdwg.mxu0
  %2061 = vmatpush.bf16.msra.mxu0 %v1680
  %2062 = vmatpush.bf16.msra.mxu0 %v1676
  %2063 = vmatpush.bf16.msra.mxu0 %v1672
  %2064 = vmatpush.bf16.msra.mxu0 %v1668
  %2065 = vmatpush.bf16.msra.mxu0 %v1664
  %2066 = vmatpush.bf16.msra.mxu0 %v1660
  %2067 = vmatpush.bf16.msra.mxu0 %v1656
  %2068 = vmatpush.bf16.msra.mxu0 %v1652
  %2069 = vmatmul.bf16.gmra.mxu0 %v1123
  %v2070 = vpop.f32.mrf.mxu0
  %v2071 = vadd.f32 %v1260, %v2070
  %v2072 = vpop.f32.mrf.mxu0
  %2073 = vdwg.mxu0
  %2074 = vmatpush.bf16.msra.mxu0 %v1712
  %2075 = vmatpush.bf16.msra.mxu0 %v1708
  %2076 = vmatpush.bf16.msra.mxu0 %v1704
  %2077 = vmatpush.bf16.msra.mxu0 %v1700
  %2078 = vmatpush.bf16.msra.mxu0 %v1696
  %2079 = vmatpush.bf16.msra.mxu0 %v1692
  %2080 = vmatpush.bf16.msra.mxu0 %v1688
  %2081 = vmatpush.bf16.msra.mxu0 %v1684
  %2082 = vmatmul.bf16.gmra.mxu0 %v1124
  %v2083 = vpop.f32.mrf.mxu0
  %v2084 = vadd.f32 %v2071, %v2083
  %v2085 = vpop.f32.mrf.mxu0
  %2086 = vdwg.mxu0
  %2087 = vmatpush.bf16.msra.mxu0 %v1744
  %2088 = vmatpush.bf16.msra.mxu0 %v1740
  %2089 = vmatpush.bf16.msra.mxu0 %v1736
  %2090 = vmatpush.bf16.msra.mxu0 %v1732
  %2091 = vmatpush.bf16.msra.mxu0 %v1728
  %2092 = vmatpush.bf16.msra.mxu0 %v1724
  %2093 = vmatpush.bf16.msra.mxu0 %v1720
  %2094 = vmatpush.bf16.msra.mxu0 %v1716
  %2095 = vmatmul.bf16.gmra.mxu0 %v1125
  %v2096 = vpop.f32.mrf.mxu0
  %v2097 = vadd.f32 %v2084, %v2096
  %v2098 = vpop.f32.mrf.mxu0
  %2099 = vdwg.mxu0
  %2100 = vmatpush.bf16.msra.mxu0 %v1776
  %2101 = vmatpush.bf16.msra.mxu0 %v1772
  %2102 = vmatpush.bf16.msra.mxu0 %v1768
  %2103 = vmatpush.bf16.msra.mxu0 %v1764
  %2104 = vmatpush.bf16.msra.mxu0 %v1760
  %2105 = vmatpush.bf16.msra.mxu0 %v1756
  %2106 = vmatpush.bf16.msra.mxu0 %v1752
  %2107 = vmatpush.bf16.msra.mxu0 %v1748
  %2108 = vmatmul.bf16.gmra.mxu0 %v1126
  %v2109 = vpop.f32.mrf.mxu0
  %v2110 = vadd.f32 %v2097, %v2109
  %v2111 = vpop.f32.mrf.mxu0
  %2112 = vdwg.mxu0
  %v2113 = vmax.f32 %v1954, 0.0
  %v2114 = vmax.f32 %v2006, 0.0
  %v2115 = vmax.f32 %v2058, 0.0
  %v2116 = vmax.f32 %v2110, 0.0
  %v2117 = vpack.c.bf16 %v2113, %v2113
  %v2118 = vpack.c.bf16 %v2114, %v2114
  %v2119 = vpack.c.bf16 %v2115, %v2115
  %v2120 = vpack.c.bf16 %v2116, %v2116
  %v2121 = vld [vmem:[%s7] sm:$0xf]
  %v2122 = vld [vmem:[%s7 + $0x4] sm:$0xf]
  %v2123 = vld [vmem:[%s7 + $0x8] sm:$0xf]
  %v2124 = vld [vmem:[%s7 + $0xc] sm:$0xf]
  %v2125 = vld [vmem:[%s7 + $0x10] sm:$0xf]
  %v2126 = vld [vmem:[%s7 + $0x14] sm:$0xf]
  %v2127 = vld [vmem:[%s7 + $0x18] sm:$0xf]
  %v2128 = vld [vmem:[%s7 + $0x1c] sm:$0xf]
  %v2129 = vld [vmem:[%s7 + $0x20] sm:$0xf]
  %v2130 = vld [vmem:[%s7 + $0x24] sm:$0xf]
  %v2131 = vld [vmem:[%s7 + $0x28] sm:$0xf]
  %v2132 = vld [vmem:[%s7 + $0x2c] sm:$0xf]
  %v2133 = vld [vmem:[%s7 + $0x30] sm:$0xf]
  %v2134 = vld [vmem:[%s7 + $0x34] sm:$0xf]
  %v2135 = vld [vmem:[%s7 + $0x38] sm:$0xf]
  %v2136 = vld [vmem:[%s7 + $0x3c] sm:$0xf]
  %v2137 = vld [vmem:[%s7 + $0x40] sm:$0xf]
  %v2138 = vld [vmem:[%s7 + $0x44] sm:$0xf]
  %v2139 = vld [vmem:[%s7 + $0x48] sm:$0xf]
  %v2140 = vld [vmem:[%s7 + $0x4c] sm:$0xf]
  %v2141 = vld [vmem:[%s7 + $0x50] sm:$0xf]
  %v2142 = vld [vmem:[%s7 + $0x54] sm:$0xf]
  %v2143 = vld [vmem:[%s7 + $0x58] sm:$0xf]
  %v2144 = vld [vmem:[%s7 + $0x5c] sm:$0xf]
  %v2145 = vld [vmem:[%s7 + $0x60] sm:$0xf]
  %v2146 = vld [vmem:[%s7 + $0x64] sm:$0xf]
  %v2147 = vld [vmem:[%s7 + $0x68] sm:$0xf]
  %v2148 = vld [vmem:[%s7 + $0x6c] sm:$0xf]
  %v2149 = vld [vmem:[%s7 + $0x70] sm:$0xf]
  %v2150 = vld [vmem:[%s7 + $0x74] sm:$0xf]
  %v2151 = vld [vmem:[%s7 + $0x78] sm:$0xf]
  %v2152 = vld [vmem:[%s7 + $0x7c] sm:$0xf]
  %v2153 = vld [vmem:[%s7 + $0x80] sm:$0xf]
  %v2154 = vld [vmem:[%s7 + $0x84] sm:$0xf]
  %v2155 = vld [vmem:[%s7 + $0x88] sm:$0xf]
  %v2156 = vld [vmem:[%s7 + $0x8c] sm:$0xf]
  %v2157 = vld [vmem:[%s7 + $0x90] sm:$0xf]
  %v2158 = vld [vmem:[%s7 + $0x94] sm:$0xf]
  %v2159 = vld [vmem:[%s7 + $0x98] sm:$0xf]
  %v2160 = vld [vmem:[%s7 + $0x9c] sm:$0xf]
  %v2161 = vld [vmem:[%s7 + $0xa0] sm:$0xf]
  %v2162 = vld [vmem:[%s7 + $0xa4] sm:$0xf]
  %v2163 = vld [vmem:[%s7 + $0xa8] sm:$0xf]
  %v2164 = vld [vmem:[%s7 + $0xac] sm:$0xf]
  %v2165 = vld [vmem:[%s7 + $0xb0] sm:$0xf]
  %v2166 = vld [vmem:[%s7 + $0xb4] sm:$0xf]
  %v2167 = vld [vmem:[%s7 + $0xb8] sm:$0xf]
  %v2168 = vld [vmem:[%s7 + $0xbc] sm:$0xf]
  %v2169 = vld [vmem:[%s7 + $0xc0] sm:$0xf]
  %v2170 = vld [vmem:[%s7 + $0xc4] sm:$0xf]
  %v2171 = vld [vmem:[%s7 + $0xc8] sm:$0xf]
  %v2172 = vld [vmem:[%s7 + $0xcc] sm:$0xf]
  %v2173 = vld [vmem:[%s7 + $0xd0] sm:$0xf]
  %v2174 = vld [vmem:[%s7 + $0xd4] sm:$0xf]
  %v2175 = vld [vmem:[%s7 + $0xd8] sm:$0xf]
  %v2176 = vld [vmem:[%s7 + $0xdc] sm:$0xf]
  %v2177 = vld [vmem:[%s7 + $0xe0] sm:$0xf]
  %v2178 = vld [vmem:[%s7 + $0xe4] sm:$0xf]
  %v2179 = vld [vmem:[%s7 + $0xe8] sm:$0xf]
  %v2180 = vld [vmem:[%s7 + $0xec] sm:$0xf]
  %v2181 = vld [vmem:[%s7 + $0xf0] sm:$0xf]
  %v2182 = vld [vmem:[%s7 + $0xf4] sm:$0xf]
  %v2183 = vld [vmem:[%s7 + $0xf8] sm:$0xf]
  %v2184 = vld [vmem:[%s7 + $0xfc] sm:$0xf]
  %v2185 = vld [vmem:[%s8] sm:$0x1]
  %v2187 = vperm.slane %v2185, 0
  %v2253 = vunpack.c.l.b16 %v2121
  %v2254 = vunpack.c.l.b16 %v2122
  %v2255 = vunpack.c.l.b16 %v2123
  %v2256 = vunpack.c.l.b16 %v2124
  %v2257 = vunpack.c.l.b16 %v2125
  %v2258 = vunpack.c.l.b16 %v2126
  %v2259 = vunpack.c.l.b16 %v2127
  %v2260 = vunpack.c.l.b16 %v2128
  %v2261 = vunpack.c.l.b16 %v2129
  %v2262 = vunpack.c.l.b16 %v2130
  %v2263 = vunpack.c.l.b16 %v2131
  %v2264 = vunpack.c.l.b16 %v2132
  %v2265 = vunpack.c.l.b16 %v2133
  %v2266 = vunpack.c.l.b16 %v2134
  %v2267 = vunpack.c.l.b16 %v2135
  %v2268 = vunpack.c.l.b16 %v2136
  %v2269 = vunpack.c.l.b16 %v2137
  %v2270 = vunpack.c.l.b16 %v2138
  %v2271 = vunpack.c.l.b16 %v2139
  %v2272 = vunpack.c.l.b16 %v2140
  %v2273 = vunpack.c.l.b16 %v2141
  %v2274 = vunpack.c.l.b16 %v2142
  %v2275 = vunpack.c.l.b16 %v2143
  %v2276 = vunpack.c.l.b16 %v2144
  %v2277 = vunpack.c.l.b16 %v2145
  %v2278 = vunpack.c.l.b16 %v2146
  %v2279 = vunpack.c.l.b16 %v2147
  %v2280 = vunpack.c.l.b16 %v2148
  %v2281 = vunpack.c.l.b16 %v2149
  %v2282 = vunpack.c.l.b16 %v2150
  %v2283 = vunpack.c.l.b16 %v2151
  %v2284 = vunpack.c.l.b16 %v2152
  %v2285 = vunpack.c.l.b16 %v2153
  %v2286 = vunpack.c.l.b16 %v2154
  %v2287 = vunpack.c.l.b16 %v2155
  %v2288 = vunpack.c.l.b16 %v2156
  %v2289 = vunpack.c.l.b16 %v2157
  %v2290 = vunpack.c.l.b16 %v2158
  %v2291 = vunpack.c.l.b16 %v2159
  %v2292 = vunpack.c.l.b16 %v2160
  %v2293 = vunpack.c.l.b16 %v2161
  %v2294 = vunpack.c.l.b16 %v2162
  %v2295 = vunpack.c.l.b16 %v2163
  %v2296 = vunpack.c.l.b16 %v2164
  %v2297 = vunpack.c.l.b16 %v2165
  %v2298 = vunpack.c.l.b16 %v2166
  %v2299 = vunpack.c.l.b16 %v2167
  %v2300 = vunpack.c.l.b16 %v2168
  %v2301 = vunpack.c.l.b16 %v2169
  %v2302 = vunpack.c.l.b16 %v2170
  %v2303 = vunpack.c.l.b16 %v2171
  %v2304 = vunpack.c.l.b16 %v2172
  %v2305 = vunpack.c.l.b16 %v2173
  %v2306 = vunpack.c.l.b16 %v2174
  %v2307 = vunpack.c.l.b16 %v2175
  %v2308 = vunpack.c.l.b16 %v2176
  %v2309 = vunpack.c.l.b16 %v2177
  %v2310 = vunpack.c.l.b16 %v2178
  %v2311 = vunpack.c.l.b16 %v2179
  %v2312 = vunpack.c.l.b16 %v2180
  %v2313 = vunpack.c.l.b16 %v2181
  %v2314 = vunpack.c.l.b16 %v2182
  %v2315 = vunpack.c.l.b16 %v2183
  %v2316 = vunpack.c.l.b16 %v2184
  %v2317 = vpack.c.b16 %v2254, %v2253
  %v2318 = vpack.c.b16 %v2256, %v2255
  %v2319 = vpack.c.b16 %v2258, %v2257
  %v2320 = vpack.c.b16 %v2260, %v2259
  %v2321 = vpack.c.b16 %v2262, %v2261
  %v2322 = vpack.c.b16 %v2264, %v2263
  %v2323 = vpack.c.b16 %v2266, %v2265
  %v2324 = vpack.c.b16 %v2268, %v2267
  %v2325 = vpack.c.b16 %v2270, %v2269
  %v2326 = vpack.c.b16 %v2272, %v2271
  %v2327 = vpack.c.b16 %v2274, %v2273
  %v2328 = vpack.c.b16 %v2276, %v2275
  %v2329 = vpack.c.b16 %v2278, %v2277
  %v2330 = vpack.c.b16 %v2280, %v2279
  %v2331 = vpack.c.b16 %v2282, %v2281
  %v2332 = vpack.c.b16 %v2284, %v2283
  %v2333 = vpack.c.b16 %v2286, %v2285
  %v2334 = vpack.c.b16 %v2288, %v2287
  %v2335 = vpack.c.b16 %v2290, %v2289
  %v2336 = vpack.c.b16 %v2292, %v2291
  %v2337 = vpack.c.b16 %v2294, %v2293
  %v2338 = vpack.c.b16 %v2296, %v2295
  %v2339 = vpack.c.b16 %v2298, %v2297
  %v2340 = vpack.c.b16 %v2300, %v2299
  %v2341 = vpack.c.b16 %v2302, %v2301
  %v2342 = vpack.c.b16 %v2304, %v2303
  %v2343 = vpack.c.b16 %v2306, %v2305
  %v2344 = vpack.c.b16 %v2308, %v2307
  %v2345 = vpack.c.b16 %v2310, %v2309
  %v2346 = vpack.c.b16 %v2312, %v2311
  %v2347 = vpack.c.b16 %v2314, %v2313
  %v2348 = vpack.c.b16 %v2316, %v2315
  %2381 = vmatpush.bf16.msra.mxu0 %v2324
  %2382 = vmatpush.bf16.msra.mxu0 %v2323
  %2383 = vmatpush.bf16.msra.mxu0 %v2322
  %2384 = vmatpush.bf16.msra.mxu0 %v2321
  %2385 = vmatpush.bf16.msra.mxu0 %v2320
  %2386 = vmatpush.bf16.msra.mxu0 %v2319
  %2387 = vmatpush.bf16.msra.mxu0 %v2318
  %2388 = vmatpush.bf16.msra.mxu0 %v2317
  %2389 = vmatmul.bf16.gmra.mxu0 %v2117
  %v2390 = vpop.f32.mrf.mxu0
  %v2391 = vadd.f32 %v2187, %v2390
  %v2392 = vpop.f32.mrf.mxu0
  %2393 = vdwg.mxu0
  %2394 = vmatpush.bf16.msra.mxu0 %v2332
  %2395 = vmatpush.bf16.msra.mxu0 %v2331
  %2396 = vmatpush.bf16.msra.mxu0 %v2330
  %2397 = vmatpush.bf16.msra.mxu0 %v2329
  %2398 = vmatpush.bf16.msra.mxu0 %v2328
  %2399 = vmatpush.bf16.msra.mxu0 %v2327
  %2400 = vmatpush.bf16.msra.mxu0 %v2326
  %2401 = vmatpush.bf16.msra.mxu0 %v2325
  %2402 = vmatmul.bf16.gmra.mxu0 %v2118
  %v2403 = vpop.f32.mrf.mxu0
  %v2404 = vadd.f32 %v2391, %v2403
  %v2405 = vpop.f32.mrf.mxu0
  %2406 = vdwg.mxu0
  %2407 = vmatpush.bf16.msra.mxu0 %v2340
  %2408 = vmatpush.bf16.msra.mxu0 %v2339
  %2409 = vmatpush.bf16.msra.mxu0 %v2338
  %2410 = vmatpush.bf16.msra.mxu0 %v2337
  %2411 = vmatpush.bf16.msra.mxu0 %v2336
  %2412 = vmatpush.bf16.msra.mxu0 %v2335
  %2413 = vmatpush.bf16.msra.mxu0 %v2334
  %2414 = vmatpush.bf16.msra.mxu0 %v2333
  %2415 = vmatmul.bf16.gmra.mxu0 %v2119
  %v2416 = vpop.f32.mrf.mxu0
  %v2417 = vadd.f32 %v2404, %v2416
  %v2418 = vpop.f32.mrf.mxu0
  %2419 = vdwg.mxu0
  %2420 = vmatpush.bf16.msra.mxu0 %v2348
  %2421 = vmatpush.bf16.msra.mxu0 %v2347
  %2422 = vmatpush.bf16.msra.mxu0 %v2346
  %2423 = vmatpush.bf16.msra.mxu0 %v2345
  %2424 = vmatpush.bf16.msra.mxu0 %v2344
  %2425 = vmatpush.bf16.msra.mxu0 %v2343
  %2426 = vmatpush.bf16.msra.mxu0 %v2342
  %2427 = vmatpush.bf16.msra.mxu0 %v2341
  %2428 = vmatmul.bf16.gmra.mxu0 %v2120
  %v2429 = vpop.f32.mrf.mxu0
  %v2430 = vadd.f32 %v2417, %v2429
  %v2431 = vpop.f32.mrf.mxu0
  %2432 = vdwg.mxu0
  %2433 = vst [vmem:[%s9] sm:$0xff] %v2430
  // Predicated region
  $region38: #{model_forward.1} parent=0 // pred_check
    _
  $region39: #{model_forward.1} parent=0 // pred_check_branch
    %2435 = sbr.rel (0) target = $region41
  $region40: #{model_forward.1} parent=0 // pred_region
    _
  $region41: #{model_forward.1} parent=0 // pred_fallthru
    _
  // Predicated region
  $region42: #{model_forward.1} parent=0 // pred_check
    _
  $region43: #{model_forward.1} parent=0 // pred_check_branch
    %2437 = sbr.rel (0) target = $region45
  $region44: #{model_forward.1} parent=0 // pred_region
    _
  $region45: #{model_forward.1} parent=0 // pred_fallthru
    _

</llo_original>
